<compile_context>
chip_gen: v5e
topology: v5e:2x2
jax: 0.10.0
libtpu: 0.0.40
codegen_flags: <defaults>
</compile_context>

<pallas_src>
import jax
import jax.numpy as jnp
from jax.experimental import pallas as pl
from jax.experimental.pallas import tpu as pltpu

LN_EPS = 1e-5                       # PyTorch LayerNorm default eps
_MAX_BLOCK_BYTES = 2 * 1024 * 1024  # per-tile cap -> ~8 MiB resident with double buffering


def _time_mixing_kernel(x_ref, w_ref, b_ref, gamma_ref, beta_ref, o_ref):
    """One (1, C, TH, W) NCHW tile: 1x1 conv over C + ReLU + residual + LayerNorm(W)."""
    C = x_ref.shape[1]
    gamma = gamma_ref[...]          # (1, W) — broadcasts over the TH rows
    beta = beta_ref[...]            # (1, W)

    for o in range(C):              # static unroll over output (seq) channels
        # y[o] = b[o] + sum_c w[o, c] * x[c]   — VPU scalar-broadcast MACs (weights in SMEM).
        acc = x_ref[0, 0] * w_ref[o, 0]
        for c in range(1, C):
            acc = acc + x_ref[0, c] * w_ref[o, c]
        y = jnp.maximum(acc + b_ref[o], 0.0)       # ReLU (dropout == identity in eval mode)

        z = x_ref[0, o] + y                        # residual add, (TH, W)

        # LayerNorm over the lane axis (norm_dim), biased variance, eps = 1e-5 (f32 stats).
        mean = jnp.mean(z, axis=-1, keepdims=True)
        zc = z - mean
        var = jnp.mean(zc * zc, axis=-1, keepdims=True)
        zn = zc * jax.lax.rsqrt(var + LN_EPS)

        o_ref[0, o] = zn * gamma + beta


def _choose_th(C, H, W, itemsize):
    """Largest H-chunk (multiple of 8, or full H) keeping one tile <= _MAX_BLOCK_BYTES."""
    if C * H * W * itemsize <= _MAX_BLOCK_BYTES:
        return H
    th = (_MAX_BLOCK_BYTES // (C * W * itemsize)) // 8 * 8
    return int(max(8, min(th, H)))


@jax.jit
def time_mixing(x, conv_w, conv_b, ln_gamma, ln_beta):
    """x: (N, C, H, W) NCHW with C = seq_len, H = num_nodes, W = norm_dim (float32)."""
    N, C, H, W = x.shape
    TH = _choose_th(C, H, W, x.dtype.itemsize)
    grid = (N, pl.cdiv(H, TH))      # both axes independent -> "parallel" (megacore-friendly)

    gamma2 = ln_gamma.reshape(1, W)
    beta2 = ln_beta.reshape(1, W)

    return pl.pallas_call(
        _time_mixing_kernel,
        out_shape=jax.ShapeDtypeStruct((N, C, H, W), x.dtype),
        grid_spec=pltpu.PrefetchScalarGridSpec(
            num_scalar_prefetch=0,
            grid=grid,
            in_specs=[
                pl.BlockSpec((1, C, TH, W), lambda n, h: (n, 0, h, 0)),     # x tile (NCHW)
                pl.BlockSpec(memory_space=pltpu.MemorySpace.SMEM),          # conv weight (C, C)
                pl.BlockSpec(memory_space=pltpu.MemorySpace.SMEM),          # conv bias (C,)
                pl.BlockSpec((1, W), lambda n, h: (0, 0)),                  # LN gamma
                pl.BlockSpec((1, W), lambda n, h: (0, 0)),                  # LN beta
            ],
            out_specs=pl.BlockSpec((1, C, TH, W), lambda n, h: (n, 0, h, 0)),
        ),
        compiler_params=pltpu.CompilerParams(
            dimension_semantics=("parallel", "parallel"),
        ),
    )(x, conv_w, conv_b, gamma2, beta2)


@jax.jit
def _reference(x, conv_w, conv_b, ln_gamma, ln_beta):
    # Pure-JAX reference (HIGHEST precision so the f32 oracle matches the exact-f32 kernel).
    y = jnp.einsum("oc,nchw->nohw", conv_w, x,
                   precision=jax.lax.Precision.HIGHEST) + conv_b[None, :, None, None]
    y = jnp.maximum(y, 0.0)
    z = x + y
    mean = jnp.mean(z, axis=-1, keepdims=True)
    var = jnp.mean((z - mean) ** 2, axis=-1, keepdims=True)
    zn = (z - mean) * jax.lax.rsqrt(var + LN_EPS)
    return zn * ln_gamma[None, None, None, :] + ln_beta[None, None, None, :]


if __name__ == "__main__":
    # Small shapes consistent with BGBlock's TimeMixing: N = batch, C = seq_len,
    # H = num_nodes, W = norm_dim (encoder_dim1 / forecast_hidden_dim -> lane-dense 128).
    N, seq_len, num_nodes, norm_dim = 2, 8, 4, 128

    key = jax.random.PRNGKey(0)
    kx, kw, kb, kg, kbt = jax.random.split(key, 5)

    x = jax.random.normal(kx, (N, seq_len, num_nodes, norm_dim), dtype=jnp.float32)

    # Conv2d 1x1 init (weight (out=seq_len, in=seq_len), bias (seq_len,)); LN affine randomized
    # slightly to exercise the gamma/beta path.
    bound = 1.0 / (seq_len ** 0.5)
    conv_w = jax.random.uniform(kw, (seq_len, seq_len), jnp.float32, -bound, bound)
    conv_b = jax.random.uniform(kb, (seq_len,), jnp.float32, -bound, bound)
    ln_gamma = 1.0 + 0.1 * jax.random.normal(kg, (norm_dim,), jnp.float32)
    ln_beta = 0.1 * jax.random.normal(kbt, (norm_dim,), jnp.float32)

    out = jax.block_until_ready(time_mixing(x, conv_w, conv_b, ln_gamma, ln_beta))

    ref = _reference(x, conv_w, conv_b, ln_gamma, ln_beta)
    assert out.shape == (N, seq_len, num_nodes, norm_dim)
    assert jnp.allclose(out, ref, atol=1e-5, rtol=1e-5), (
        f"mismatch vs reference, max abs diff = {jnp.max(jnp.abs(out - ref))}")

    print("KERNEL_OK")
</pallas_src>

<mosaic_0001>
module attributes {stable_mosaic.version = 11 : i64} {
  func.func @_time_mixing_kernel(%arg0: i32, %arg1: i32, %arg2: memref<1x8x4x128xf32, #tpu.memory_space<vmem>>, %arg3: memref<8x8xf32, #tpu.memory_space<smem>>, %arg4: memref<8xf32, #tpu.memory_space<smem>>, %arg5: memref<1x128xf32, #tpu.memory_space<vmem>>, %arg6: memref<1x128xf32, #tpu.memory_space<vmem>>, %arg7: memref<1x8x4x128xf32, #tpu.memory_space<vmem>>) attributes {dimension_semantics = [#tpu.dimension_semantics<parallel>, #tpu.dimension_semantics<parallel>], iteration_bounds = array<i64: 2, 1>, scalar_prefetch = 0 : i64, scratch_operands = 0 : i64, tpu.core_type = #tpu.core_type<tc>, window_params = [{transform_indices = @transform_0, window_bounds = array<i64: 1, 8, 4, 128>}, {transform_indices = @transform_1, window_bounds = array<i64: 8, 8>}, {transform_indices = @transform_2, window_bounds = array<i64: 8>}, {pipeline_mode = #tpu.pipeline_mode<synchronous>, transform_indices = @transform_3, window_bounds = array<i64: 1, 128>}, {pipeline_mode = #tpu.pipeline_mode<synchronous>, transform_indices = @transform_4, window_bounds = array<i64: 1, 128>}, {transform_indices = @transform_5, window_bounds = array<i64: 1, 8, 4, 128>}]} {
    %c0 = arith.constant 0 : index
    %c0_0 = arith.constant 0 : index
    %0 = vector.load %arg5[%c0, %c0_0] : memref<1x128xf32, #tpu.memory_space<vmem>>, vector<1x128xf32>
    %c0_1 = arith.constant 0 : index
    %c0_2 = arith.constant 0 : index
    %1 = vector.load %arg6[%c0_1, %c0_2] : memref<1x128xf32, #tpu.memory_space<vmem>>, vector<1x128xf32>
    %c0_3 = arith.constant 0 : index
    %c0_4 = arith.constant 0 : index
    %c0_5 = arith.constant 0 : index
    %c0_6 = arith.constant 0 : index
    %2 = vector.load %arg2[%c0_3, %c0_4, %c0_5, %c0_6] : memref<1x8x4x128xf32, #tpu.memory_space<vmem>>, vector<1x1x4x128xf32>
    %3 = vector.shape_cast %2 : vector<1x1x4x128xf32> to vector<4x128xf32>
    %c0_7 = arith.constant 0 : index
    %c0_8 = arith.constant 0 : index
    %4 = memref.load %arg3[%c0_7, %c0_8] : memref<8x8xf32, #tpu.memory_space<smem>>
    %5 = vector.broadcast %4 : f32 to vector<4x128xf32>
    %6 = arith.mulf %3, %5 : vector<4x128xf32>
    %c0_9 = arith.constant 0 : index
    %c1 = arith.constant 1 : index
    %c0_10 = arith.constant 0 : index
    %c0_11 = arith.constant 0 : index
    %7 = vector.load %arg2[%c0_9, %c1, %c0_10, %c0_11] : memref<1x8x4x128xf32, #tpu.memory_space<vmem>>, vector<1x1x4x128xf32>
    %8 = vector.shape_cast %7 : vector<1x1x4x128xf32> to vector<4x128xf32>
    %c0_12 = arith.constant 0 : index
    %c1_13 = arith.constant 1 : index
    %9 = memref.load %arg3[%c0_12, %c1_13] : memref<8x8xf32, #tpu.memory_space<smem>>
    %10 = vector.broadcast %9 : f32 to vector<4x128xf32>
    %11 = arith.mulf %8, %10 : vector<4x128xf32>
    %12 = arith.addf %6, %11 : vector<4x128xf32>
    %c0_14 = arith.constant 0 : index
    %c2 = arith.constant 2 : index
    %c0_15 = arith.constant 0 : index
    %c0_16 = arith.constant 0 : index
    %13 = vector.load %arg2[%c0_14, %c2, %c0_15, %c0_16] : memref<1x8x4x128xf32, #tpu.memory_space<vmem>>, vector<1x1x4x128xf32>
    %14 = vector.shape_cast %13 : vector<1x1x4x128xf32> to vector<4x128xf32>
    %c0_17 = arith.constant 0 : index
    %c2_18 = arith.constant 2 : index
    %15 = memref.load %arg3[%c0_17, %c2_18] : memref<8x8xf32, #tpu.memory_space<smem>>
    %16 = vector.broadcast %15 : f32 to vector<4x128xf32>
    %17 = arith.mulf %14, %16 : vector<4x128xf32>
    %18 = arith.addf %12, %17 : vector<4x128xf32>
    %c0_19 = arith.constant 0 : index
    %c3 = arith.constant 3 : index
    %c0_20 = arith.constant 0 : index
    %c0_21 = arith.constant 0 : index
    %19 = vector.load %arg2[%c0_19, %c3, %c0_20, %c0_21] : memref<1x8x4x128xf32, #tpu.memory_space<vmem>>, vector<1x1x4x128xf32>
    %20 = vector.shape_cast %19 : vector<1x1x4x128xf32> to vector<4x128xf32>
    %c0_22 = arith.constant 0 : index
    %c3_23 = arith.constant 3 : index
    %21 = memref.load %arg3[%c0_22, %c3_23] : memref<8x8xf32, #tpu.memory_space<smem>>
    %22 = vector.broadcast %21 : f32 to vector<4x128xf32>
    %23 = arith.mulf %20, %22 : vector<4x128xf32>
    %24 = arith.addf %18, %23 : vector<4x128xf32>
    %c0_24 = arith.constant 0 : index
    %c4 = arith.constant 4 : index
    %c0_25 = arith.constant 0 : index
    %c0_26 = arith.constant 0 : index
    %25 = vector.load %arg2[%c0_24, %c4, %c0_25, %c0_26] : memref<1x8x4x128xf32, #tpu.memory_space<vmem>>, vector<1x1x4x128xf32>
    %26 = vector.shape_cast %25 : vector<1x1x4x128xf32> to vector<4x128xf32>
    %c0_27 = arith.constant 0 : index
    %c4_28 = arith.constant 4 : index
    %27 = memref.load %arg3[%c0_27, %c4_28] : memref<8x8xf32, #tpu.memory_space<smem>>
    %28 = vector.broadcast %27 : f32 to vector<4x128xf32>
    %29 = arith.mulf %26, %28 : vector<4x128xf32>
    %30 = arith.addf %24, %29 : vector<4x128xf32>
    %c0_29 = arith.constant 0 : index
    %c5 = arith.constant 5 : index
    %c0_30 = arith.constant 0 : index
    %c0_31 = arith.constant 0 : index
    %31 = vector.load %arg2[%c0_29, %c5, %c0_30, %c0_31] : memref<1x8x4x128xf32, #tpu.memory_space<vmem>>, vector<1x1x4x128xf32>
    %32 = vector.shape_cast %31 : vector<1x1x4x128xf32> to vector<4x128xf32>
    %c0_32 = arith.constant 0 : index
    %c5_33 = arith.constant 5 : index
    %33 = memref.load %arg3[%c0_32, %c5_33] : memref<8x8xf32, #tpu.memory_space<smem>>
    %34 = vector.broadcast %33 : f32 to vector<4x128xf32>
    %35 = arith.mulf %32, %34 : vector<4x128xf32>
    %36 = arith.addf %30, %35 : vector<4x128xf32>
    %c0_34 = arith.constant 0 : index
    %c6 = arith.constant 6 : index
    %c0_35 = arith.constant 0 : index
    %c0_36 = arith.constant 0 : index
    %37 = vector.load %arg2[%c0_34, %c6, %c0_35, %c0_36] : memref<1x8x4x128xf32, #tpu.memory_space<vmem>>, vector<1x1x4x128xf32>
    %38 = vector.shape_cast %37 : vector<1x1x4x128xf32> to vector<4x128xf32>
    %c0_37 = arith.constant 0 : index
    %c6_38 = arith.constant 6 : index
    %39 = memref.load %arg3[%c0_37, %c6_38] : memref<8x8xf32, #tpu.memory_space<smem>>
    %40 = vector.broadcast %39 : f32 to vector<4x128xf32>
    %41 = arith.mulf %38, %40 : vector<4x128xf32>
    %42 = arith.addf %36, %41 : vector<4x128xf32>
    %c0_39 = arith.constant 0 : index
    %c7 = arith.constant 7 : index
    %c0_40 = arith.constant 0 : index
    %c0_41 = arith.constant 0 : index
    %43 = vector.load %arg2[%c0_39, %c7, %c0_40, %c0_41] : memref<1x8x4x128xf32, #tpu.memory_space<vmem>>, vector<1x1x4x128xf32>
    %44 = vector.shape_cast %43 : vector<1x1x4x128xf32> to vector<4x128xf32>
    %c0_42 = arith.constant 0 : index
    %c7_43 = arith.constant 7 : index
    %45 = memref.load %arg3[%c0_42, %c7_43] : memref<8x8xf32, #tpu.memory_space<smem>>
    %46 = vector.broadcast %45 : f32 to vector<4x128xf32>
    %47 = arith.mulf %44, %46 : vector<4x128xf32>
    %48 = arith.addf %42, %47 : vector<4x128xf32>
    %c0_44 = arith.constant 0 : index
    %49 = memref.load %arg4[%c0_44] : memref<8xf32, #tpu.memory_space<smem>>
    %50 = vector.broadcast %49 : f32 to vector<4x128xf32>
    %51 = arith.addf %48, %50 : vector<4x128xf32>
    %cst = arith.constant 0.000000e+00 : f32
    %52 = vector.broadcast %cst : f32 to vector<4x128xf32>
    %53 = arith.maximumf %51, %52 : vector<4x128xf32>
    %c0_45 = arith.constant 0 : index
    %c0_46 = arith.constant 0 : index
    %c0_47 = arith.constant 0 : index
    %c0_48 = arith.constant 0 : index
    %54 = vector.load %arg2[%c0_45, %c0_46, %c0_47, %c0_48] : memref<1x8x4x128xf32, #tpu.memory_space<vmem>>, vector<1x1x4x128xf32>
    %55 = vector.shape_cast %54 : vector<1x1x4x128xf32> to vector<4x128xf32>
    %56 = arith.addf %55, %53 : vector<4x128xf32>
    %cst_49 = arith.constant dense<0.000000e+00> : vector<4xf32>
    %57 = vector.multi_reduction <add>, %56, %cst_49 [1] : vector<4x128xf32> to vector<4xf32>
    %58 = vector.shape_cast %57 : vector<4xf32> to vector<4x1xf32>
    %cst_50 = arith.constant 1.280000e+02 : f32
    %59 = vector.broadcast %cst_50 : f32 to vector<4x1xf32>
    %60 = arith.divf %58, %59 : vector<4x1xf32>
    %61 = vector.broadcast %60 : vector<4x1xf32> to vector<4x128xf32>
    %62 = arith.subf %56, %61 : vector<4x128xf32>
    %63 = arith.mulf %62, %62 : vector<4x128xf32>
    %cst_51 = arith.constant dense<0.000000e+00> : vector<4xf32>
    %64 = vector.multi_reduction <add>, %63, %cst_51 [1] : vector<4x128xf32> to vector<4xf32>
    %65 = vector.shape_cast %64 : vector<4xf32> to vector<4x1xf32>
    %cst_52 = arith.constant 1.280000e+02 : f32
    %66 = vector.broadcast %cst_52 : f32 to vector<4x1xf32>
    %67 = arith.divf %65, %66 : vector<4x1xf32>
    %cst_53 = arith.constant 9.99999974E-6 : f32
    %68 = vector.broadcast %cst_53 : f32 to vector<4x1xf32>
    %69 = arith.addf %67, %68 : vector<4x1xf32>
    %70 = math.rsqrt %69 : vector<4x1xf32>
    %71 = vector.broadcast %70 : vector<4x1xf32> to vector<4x128xf32>
    %72 = arith.mulf %62, %71 : vector<4x128xf32>
    %73 = vector.broadcast %0 : vector<1x128xf32> to vector<4x128xf32>
    %74 = arith.mulf %72, %73 : vector<4x128xf32>
    %75 = vector.broadcast %1 : vector<1x128xf32> to vector<4x128xf32>
    %76 = arith.addf %74, %75 : vector<4x128xf32>
    %c0_54 = arith.constant 0 : index
    %c0_55 = arith.constant 0 : index
    %c0_56 = arith.constant 0 : index
    %c0_57 = arith.constant 0 : index
    %77 = vector.load %arg7[%c0_54, %c0_55, %c0_56, %c0_57] : memref<1x8x4x128xf32, #tpu.memory_space<vmem>>, vector<1x1x4x128xf32>
    %78 = vector.shape_cast %77 : vector<1x1x4x128xf32> to vector<4x128xf32>
    %79 = vector.shape_cast %76 : vector<4x128xf32> to vector<1x1x4x128xf32>
    tpu.vector_store %arg7[%c0_54, %c0_55, %c0_56, %c0_57], %79 {strides = array<i32>} : memref<1x8x4x128xf32, #tpu.memory_space<vmem>>, vector<1x1x4x128xf32>,
    %c0_58 = arith.constant 0 : index
    %c0_59 = arith.constant 0 : index
    %c0_60 = arith.constant 0 : index
    %c0_61 = arith.constant 0 : index
    %80 = vector.load %arg2[%c0_58, %c0_59, %c0_60, %c0_61] : memref<1x8x4x128xf32, #tpu.memory_space<vmem>>, vector<1x1x4x128xf32>
    %81 = vector.shape_cast %80 : vector<1x1x4x128xf32> to vector<4x128xf32>
    %c1_62 = arith.constant 1 : index
    %c0_63 = arith.constant 0 : index
    %82 = memref.load %arg3[%c1_62, %c0_63] : memref<8x8xf32, #tpu.memory_space<smem>>
    %83 = vector.broadcast %82 : f32 to vector<4x128xf32>
    %84 = arith.mulf %81, %83 : vector<4x128xf32>
    %c0_64 = arith.constant 0 : index
    %c1_65 = arith.constant 1 : index
    %c0_66 = arith.constant 0 : index
    %c0_67 = arith.constant 0 : index
    %85 = vector.load %arg2[%c0_64, %c1_65, %c0_66, %c0_67] : memref<1x8x4x128xf32, #tpu.memory_space<vmem>>, vector<1x1x4x128xf32>
    %86 = vector.shape_cast %85 : vector<1x1x4x128xf32> to vector<4x128xf32>
    %c1_68 = arith.constant 1 : index
    %c1_69 = arith.constant 1 : index
    %87 = memref.load %arg3[%c1_68, %c1_69] : memref<8x8xf32, #tpu.memory_space<smem>>
    %88 = vector.broadcast %87 : f32 to vector<4x128xf32>
    %89 = arith.mulf %86, %88 : vector<4x128xf32>
    %90 = arith.addf %84, %89 : vector<4x128xf32>
    %c0_70 = arith.constant 0 : index
    %c2_71 = arith.constant 2 : index
    %c0_72 = arith.constant 0 : index
    %c0_73 = arith.constant 0 : index
    %91 = vector.load %arg2[%c0_70, %c2_71, %c0_72, %c0_73] : memref<1x8x4x128xf32, #tpu.memory_space<vmem>>, vector<1x1x4x128xf32>
    %92 = vector.shape_cast %91 : vector<1x1x4x128xf32> to vector<4x128xf32>
    %c1_74 = arith.constant 1 : index
    %c2_75 = arith.constant 2 : index
    %93 = memref.load %arg3[%c1_74, %c2_75] : memref<8x8xf32, #tpu.memory_space<smem>>
    %94 = vector.broadcast %93 : f32 to vector<4x128xf32>
    %95 = arith.mulf %92, %94 : vector<4x128xf32>
    %96 = arith.addf %90, %95 : vector<4x128xf32>
    %c0_76 = arith.constant 0 : index
    %c3_77 = arith.constant 3 : index
    %c0_78 = arith.constant 0 : index
    %c0_79 = arith.constant 0 : index
    %97 = vector.load %arg2[%c0_76, %c3_77, %c0_78, %c0_79] : memref<1x8x4x128xf32, #tpu.memory_space<vmem>>, vector<1x1x4x128xf32>
    %98 = vector.shape_cast %97 : vector<1x1x4x128xf32> to vector<4x128xf32>
    %c1_80 = arith.constant 1 : index
    %c3_81 = arith.constant 3 : index
    %99 = memref.load %arg3[%c1_80, %c3_81] : memref<8x8xf32, #tpu.memory_space<smem>>
    %100 = vector.broadcast %99 : f32 to vector<4x128xf32>
    %101 = arith.mulf %98, %100 : vector<4x128xf32>
    %102 = arith.addf %96, %101 : vector<4x128xf32>
    %c0_82 = arith.constant 0 : index
    %c4_83 = arith.constant 4 : index
    %c0_84 = arith.constant 0 : index
    %c0_85 = arith.constant 0 : index
    %103 = vector.load %arg2[%c0_82, %c4_83, %c0_84, %c0_85] : memref<1x8x4x128xf32, #tpu.memory_space<vmem>>, vector<1x1x4x128xf32>
    %104 = vector.shape_cast %103 : vector<1x1x4x128xf32> to vector<4x128xf32>
    %c1_86 = arith.constant 1 : index
    %c4_87 = arith.constant 4 : index
    %105 = memref.load %arg3[%c1_86, %c4_87] : memref<8x8xf32, #tpu.memory_space<smem>>
    %106 = vector.broadcast %105 : f32 to vector<4x128xf32>
    %107 = arith.mulf %104, %106 : vector<4x128xf32>
    %108 = arith.addf %102, %107 : vector<4x128xf32>
    %c0_88 = arith.constant 0 : index
    %c5_89 = arith.constant 5 : index
    %c0_90 = arith.constant 0 : index
    %c0_91 = arith.constant 0 : index
    %109 = vector.load %arg2[%c0_88, %c5_89, %c0_90, %c0_91] : memref<1x8x4x128xf32, #tpu.memory_space<vmem>>, vector<1x1x4x128xf32>
    %110 = vector.shape_cast %109 : vector<1x1x4x128xf32> to vector<4x128xf32>
    %c1_92 = arith.constant 1 : index
    %c5_93 = arith.constant 5 : index
    %111 = memref.load %arg3[%c1_92, %c5_93] : memref<8x8xf32, #tpu.memory_space<smem>>
    %112 = vector.broadcast %111 : f32 to vector<4x128xf32>
    %113 = arith.mulf %110, %112 : vector<4x128xf32>
    %114 = arith.addf %108, %113 : vector<4x128xf32>
    %c0_94 = arith.constant 0 : index
    %c6_95 = arith.constant 6 : index
    %c0_96 = arith.constant 0 : index
    %c0_97 = arith.constant 0 : index
    %115 = vector.load %arg2[%c0_94, %c6_95, %c0_96, %c0_97] : memref<1x8x4x128xf32, #tpu.memory_space<vmem>>, vector<1x1x4x128xf32>
    %116 = vector.shape_cast %115 : vector<1x1x4x128xf32> to vector<4x128xf32>
    %c1_98 = arith.constant 1 : index
    %c6_99 = arith.constant 6 : index
    %117 = memref.load %arg3[%c1_98, %c6_99] : memref<8x8xf32, #tpu.memory_space<smem>>
    %118 = vector.broadcast %117 : f32 to vector<4x128xf32>
    %119 = arith.mulf %116, %118 : vector<4x128xf32>
    %120 = arith.addf %114, %119 : vector<4x128xf32>
    %c0_100 = arith.constant 0 : index
    %c7_101 = arith.constant 7 : index
    %c0_102 = arith.constant 0 : index
    %c0_103 = arith.constant 0 : index
    %121 = vector.load %arg2[%c0_100, %c7_101, %c0_102, %c0_103] : memref<1x8x4x128xf32, #tpu.memory_space<vmem>>, vector<1x1x4x128xf32>
    %122 = vector.shape_cast %121 : vector<1x1x4x128xf32> to vector<4x128xf32>
    %c1_104 = arith.constant 1 : index
    %c7_105 = arith.constant 7 : index
    %123 = memref.load %arg3[%c1_104, %c7_105] : memref<8x8xf32, #tpu.memory_space<smem>>
    %124 = vector.broadcast %123 : f32 to vector<4x128xf32>
    %125 = arith.mulf %122, %124 : vector<4x128xf32>
    %126 = arith.addf %120, %125 : vector<4x128xf32>
    %c1_106 = arith.constant 1 : index
    %127 = memref.load %arg4[%c1_106] : memref<8xf32, #tpu.memory_space<smem>>
    %128 = vector.broadcast %127 : f32 to vector<4x128xf32>
    %129 = arith.addf %126, %128 : vector<4x128xf32>
    %cst_107 = arith.constant 0.000000e+00 : f32
    %130 = vector.broadcast %cst_107 : f32 to vector<4x128xf32>
    %131 = arith.maximumf %129, %130 : vector<4x128xf32>
    %c0_108 = arith.constant 0 : index
    %c1_109 = arith.constant 1 : index
    %c0_110 = arith.constant 0 : index
    %c0_111 = arith.constant 0 : index
    %132 = vector.load %arg2[%c0_108, %c1_109, %c0_110, %c0_111] : memref<1x8x4x128xf32, #tpu.memory_space<vmem>>, vector<1x1x4x128xf32>
    %133 = vector.shape_cast %132 : vector<1x1x4x128xf32> to vector<4x128xf32>
    %134 = arith.addf %133, %131 : vector<4x128xf32>
    %cst_112 = arith.constant dense<0.000000e+00> : vector<4xf32>
    %135 = vector.multi_reduction <add>, %134, %cst_112 [1] : vector<4x128xf32> to vector<4xf32>
    %136 = vector.shape_cast %135 : vector<4xf32> to vector<4x1xf32>
    %cst_113 = arith.constant 1.280000e+02 : f32
    %137 = vector.broadcast %cst_113 : f32 to vector<4x1xf32>
    %138 = arith.divf %136, %137 : vector<4x1xf32>
    %139 = vector.broadcast %138 : vector<4x1xf32> to vector<4x128xf32>
    %140 = arith.subf %134, %139 : vector<4x128xf32>
    %141 = arith.mulf %140, %140 : vector<4x128xf32>
    %cst_114 = arith.constant dense<0.000000e+00> : vector<4xf32>
    %142 = vector.multi_reduction <add>, %141, %cst_114 [1] : vector<4x128xf32> to vector<4xf32>
    %143 = vector.shape_cast %142 : vector<4xf32> to vector<4x1xf32>
    %cst_115 = arith.constant 1.280000e+02 : f32
    %144 = vector.broadcast %cst_115 : f32 to vector<4x1xf32>
    %145 = arith.divf %143, %144 : vector<4x1xf32>
    %cst_116 = arith.constant 9.99999974E-6 : f32
    %146 = vector.broadcast %cst_116 : f32 to vector<4x1xf32>
    %147 = arith.addf %145, %146 : vector<4x1xf32>
    %148 = math.rsqrt %147 : vector<4x1xf32>
    %149 = vector.broadcast %148 : vector<4x1xf32> to vector<4x128xf32>
    %150 = arith.mulf %140, %149 : vector<4x128xf32>
    %151 = vector.broadcast %0 : vector<1x128xf32> to vector<4x128xf32>
    %152 = arith.mulf %150, %151 : vector<4x128xf32>
    %153 = vector.broadcast %1 : vector<1x128xf32> to vector<4x128xf32>
    %154 = arith.addf %152, %153 : vector<4x128xf32>
    %c0_117 = arith.constant 0 : index
    %c1_118 = arith.constant 1 : index
    %c0_119 = arith.constant 0 : index
    %c0_120 = arith.constant 0 : index
    %155 = vector.load %arg7[%c0_117, %c1_118, %c0_119, %c0_120] : memref<1x8x4x128xf32, #tpu.memory_space<vmem>>, vector<1x1x4x128xf32>
    %156 = vector.shape_cast %155 : vector<1x1x4x128xf32> to vector<4x128xf32>
    %157 = vector.shape_cast %154 : vector<4x128xf32> to vector<1x1x4x128xf32>
    tpu.vector_store %arg7[%c0_117, %c1_118, %c0_119, %c0_120], %157 {strides = array<i32>} : memref<1x8x4x128xf32, #tpu.memory_space<vmem>>, vector<1x1x4x128xf32>,
    %c0_121 = arith.constant 0 : index
    %c0_122 = arith.constant 0 : index
    %c0_123 = arith.constant 0 : index
    %c0_124 = arith.constant 0 : index
    %158 = vector.load %arg2[%c0_121, %c0_122, %c0_123, %c0_124] : memref<1x8x4x128xf32, #tpu.memory_space<vmem>>, vector<1x1x4x128xf32>
    %159 = vector.shape_cast %158 : vector<1x1x4x128xf32> to vector<4x128xf32>
    %c2_125 = arith.constant 2 : index
    %c0_126 = arith.constant 0 : index
    %160 = memref.load %arg3[%c2_125, %c0_126] : memref<8x8xf32, #tpu.memory_space<smem>>
    %161 = vector.broadcast %160 : f32 to vector<4x128xf32>
    %162 = arith.mulf %159, %161 : vector<4x128xf32>
    %c0_127 = arith.constant 0 : index
    %c1_128 = arith.constant 1 : index
    %c0_129 = arith.constant 0 : index
    %c0_130 = arith.constant 0 : index
    %163 = vector.load %arg2[%c0_127, %c1_128, %c0_129, %c0_130] : memref<1x8x4x128xf32, #tpu.memory_space<vmem>>, vector<1x1x4x128xf32>
    %164 = vector.shape_cast %163 : vector<1x1x4x128xf32> to vector<4x128xf32>
    %c2_131 = arith.constant 2 : index
    %c1_132 = arith.constant 1 : index
    %165 = memref.load %arg3[%c2_131, %c1_132] : memref<8x8xf32, #tpu.memory_space<smem>>
    %166 = vector.broadcast %165 : f32 to vector<4x128xf32>
    %167 = arith.mulf %164, %166 : vector<4x128xf32>
    %168 = arith.addf %162, %167 : vector<4x128xf32>
    %c0_133 = arith.constant 0 : index
    %c2_134 = arith.constant 2 : index
    %c0_135 = arith.constant 0 : index
    %c0_136 = arith.constant 0 : index
    %169 = vector.load %arg2[%c0_133, %c2_134, %c0_135, %c0_136] : memref<1x8x4x128xf32, #tpu.memory_space<vmem>>, vector<1x1x4x128xf32>
    %170 = vector.shape_cast %169 : vector<1x1x4x128xf32> to vector<4x128xf32>
    %c2_137 = arith.constant 2 : index
    %c2_138 = arith.constant 2 : index
    %171 = memref.load %arg3[%c2_137, %c2_138] : memref<8x8xf32, #tpu.memory_space<smem>>
    %172 = vector.broadcast %171 : f32 to vector<4x128xf32>
    %173 = arith.mulf %170, %172 : vector<4x128xf32>
    %174 = arith.addf %168, %173 : vector<4x128xf32>
    %c0_139 = arith.constant 0 : index
    %c3_140 = arith.constant 3 : index
    %c0_141 = arith.constant 0 : index
    %c0_142 = arith.constant 0 : index
    %175 = vector.load %arg2[%c0_139, %c3_140, %c0_141, %c0_142] : memref<1x8x4x128xf32, #tpu.memory_space<vmem>>, vector<1x1x4x128xf32>
    %176 = vector.shape_cast %175 : vector<1x1x4x128xf32> to vector<4x128xf32>
    %c2_143 = arith.constant 2 : index
    %c3_144 = arith.constant 3 : index
    %177 = memref.load %arg3[%c2_143, %c3_144] : memref<8x8xf32, #tpu.memory_space<smem>>
    %178 = vector.broadcast %177 : f32 to vector<4x128xf32>
    %179 = arith.mulf %176, %178 : vector<4x128xf32>
    %180 = arith.addf %174, %179 : vector<4x128xf32>
    %c0_145 = arith.constant 0 : index
    %c4_146 = arith.constant 4 : index
    %c0_147 = arith.constant 0 : index
    %c0_148 = arith.constant 0 : index
    %181 = vector.load %arg2[%c0_145, %c4_146, %c0_147, %c0_148] : memref<1x8x4x128xf32, #tpu.memory_space<vmem>>, vector<1x1x4x128xf32>
    %182 = vector.shape_cast %181 : vector<1x1x4x128xf32> to vector<4x128xf32>
    %c2_149 = arith.constant 2 : index
    %c4_150 = arith.constant 4 : index
    %183 = memref.load %arg3[%c2_149, %c4_150] : memref<8x8xf32, #tpu.memory_space<smem>>
    %184 = vector.broadcast %183 : f32 to vector<4x128xf32>
    %185 = arith.mulf %182, %184 : vector<4x128xf32>
    %186 = arith.addf %180, %185 : vector<4x128xf32>
    %c0_151 = arith.constant 0 : index
    %c5_152 = arith.constant 5 : index
    %c0_153 = arith.constant 0 : index
    %c0_154 = arith.constant 0 : index
    %187 = vector.load %arg2[%c0_151, %c5_152, %c0_153, %c0_154] : memref<1x8x4x128xf32, #tpu.memory_space<vmem>>, vector<1x1x4x128xf32>
    %188 = vector.shape_cast %187 : vector<1x1x4x128xf32> to vector<4x128xf32>
    %c2_155 = arith.constant 2 : index
    %c5_156 = arith.constant 5 : index
    %189 = memref.load %arg3[%c2_155, %c5_156] : memref<8x8xf32, #tpu.memory_space<smem>>
    %190 = vector.broadcast %189 : f32 to vector<4x128xf32>
    %191 = arith.mulf %188, %190 : vector<4x128xf32>
    %192 = arith.addf %186, %191 : vector<4x128xf32>
    %c0_157 = arith.constant 0 : index
    %c6_158 = arith.constant 6 : index
    %c0_159 = arith.constant 0 : index
    %c0_160 = arith.constant 0 : index
    %193 = vector.load %arg2[%c0_157, %c6_158, %c0_159, %c0_160] : memref<1x8x4x128xf32, #tpu.memory_space<vmem>>, vector<1x1x4x128xf32>
    %194 = vector.shape_cast %193 : vector<1x1x4x128xf32> to vector<4x128xf32>
    %c2_161 = arith.constant 2 : index
    %c6_162 = arith.constant 6 : index
    %195 = memref.load %arg3[%c2_161, %c6_162] : memref<8x8xf32, #tpu.memory_space<smem>>
    %196 = vector.broadcast %195 : f32 to vector<4x128xf32>
    %197 = arith.mulf %194, %196 : vector<4x128xf32>
    %198 = arith.addf %192, %197 : vector<4x128xf32>
    %c0_163 = arith.constant 0 : index
    %c7_164 = arith.constant 7 : index
    %c0_165 = arith.constant 0 : index
    %c0_166 = arith.constant 0 : index
    %199 = vector.load %arg2[%c0_163, %c7_164, %c0_165, %c0_166] : memref<1x8x4x128xf32, #tpu.memory_space<vmem>>, vector<1x1x4x128xf32>
    %200 = vector.shape_cast %199 : vector<1x1x4x128xf32> to vector<4x128xf32>
    %c2_167 = arith.constant 2 : index
    %c7_168 = arith.constant 7 : index
    %201 = memref.load %arg3[%c2_167, %c7_168] : memref<8x8xf32, #tpu.memory_space<smem>>
    %202 = vector.broadcast %201 : f32 to vector<4x128xf32>
    %203 = arith.mulf %200, %202 : vector<4x128xf32>
    %204 = arith.addf %198, %203 : vector<4x128xf32>
    %c2_169 = arith.constant 2 : index
    %205 = memref.load %arg4[%c2_169] : memref<8xf32, #tpu.memory_space<smem>>
    %206 = vector.broadcast %205 : f32 to vector<4x128xf32>
    %207 = arith.addf %204, %206 : vector<4x128xf32>
    %cst_170 = arith.constant 0.000000e+00 : f32
    %208 = vector.broadcast %cst_170 : f32 to vector<4x128xf32>
    %209 = arith.maximumf %207, %208 : vector<4x128xf32>
    %c0_171 = arith.constant 0 : index
    %c2_172 = arith.constant 2 : index
    %c0_173 = arith.constant 0 : index
    %c0_174 = arith.constant 0 : index
    %210 = vector.load %arg2[%c0_171, %c2_172, %c0_173, %c0_174] : memref<1x8x4x128xf32, #tpu.memory_space<vmem>>, vector<1x1x4x128xf32>
    %211 = vector.shape_cast %210 : vector<1x1x4x128xf32> to vector<4x128xf32>
    %212 = arith.addf %211, %209 : vector<4x128xf32>
    %cst_175 = arith.constant dense<0.000000e+00> : vector<4xf32>
    %213 = vector.multi_reduction <add>, %212, %cst_175 [1] : vector<4x128xf32> to vector<4xf32>
    %214 = vector.shape_cast %213 : vector<4xf32> to vector<4x1xf32>
    %cst_176 = arith.constant 1.280000e+02 : f32
    %215 = vector.broadcast %cst_176 : f32 to vector<4x1xf32>
    %216 = arith.divf %214, %215 : vector<4x1xf32>
    %217 = vector.broadcast %216 : vector<4x1xf32> to vector<4x128xf32>
    %218 = arith.subf %212, %217 : vector<4x128xf32>
    %219 = arith.mulf %218, %218 : vector<4x128xf32>
    %cst_177 = arith.constant dense<0.000000e+00> : vector<4xf32>
    %220 = vector.multi_reduction <add>, %219, %cst_177 [1] : vector<4x128xf32> to vector<4xf32>
    %221 = vector.shape_cast %220 : vector<4xf32> to vector<4x1xf32>
    %cst_178 = arith.constant 1.280000e+02 : f32
    %222 = vector.broadcast %cst_178 : f32 to vector<4x1xf32>
    %223 = arith.divf %221, %222 : vector<4x1xf32>
    %cst_179 = arith.constant 9.99999974E-6 : f32
    %224 = vector.broadcast %cst_179 : f32 to vector<4x1xf32>
    %225 = arith.addf %223, %224 : vector<4x1xf32>
    %226 = math.rsqrt %225 : vector<4x1xf32>
    %227 = vector.broadcast %226 : vector<4x1xf32> to vector<4x128xf32>
    %228 = arith.mulf %218, %227 : vector<4x128xf32>
    %229 = vector.broadcast %0 : vector<1x128xf32> to vector<4x128xf32>
    %230 = arith.mulf %228, %229 : vector<4x128xf32>
    %231 = vector.broadcast %1 : vector<1x128xf32> to vector<4x128xf32>
    %232 = arith.addf %230, %231 : vector<4x128xf32>
    %c0_180 = arith.constant 0 : index
    %c2_181 = arith.constant 2 : index
    %c0_182 = arith.constant 0 : index
    %c0_183 = arith.constant 0 : index
    %233 = vector.load %arg7[%c0_180, %c2_181, %c0_182, %c0_183] : memref<1x8x4x128xf32, #tpu.memory_space<vmem>>, vector<1x1x4x128xf32>
    %234 = vector.shape_cast %233 : vector<1x1x4x128xf32> to vector<4x128xf32>
    %235 = vector.shape_cast %232 : vector<4x128xf32> to vector<1x1x4x128xf32>
    tpu.vector_store %arg7[%c0_180, %c2_181, %c0_182, %c0_183], %235 {strides = array<i32>} : memref<1x8x4x128xf32, #tpu.memory_space<vmem>>, vector<1x1x4x128xf32>,
    %c0_184 = arith.constant 0 : index
    %c0_185 = arith.constant 0 : index
    %c0_186 = arith.constant 0 : index
    %c0_187 = arith.constant 0 : index
    %236 = vector.load %arg2[%c0_184, %c0_185, %c0_186, %c0_187] : memref<1x8x4x128xf32, #tpu.memory_space<vmem>>, vector<1x1x4x128xf32>
    %237 = vector.shape_cast %236 : vector<1x1x4x128xf32> to vector<4x128xf32>
    %c3_188 = arith.constant 3 : index
    %c0_189 = arith.constant 0 : index
    %238 = memref.load %arg3[%c3_188, %c0_189] : memref<8x8xf32, #tpu.memory_space<smem>>
    %239 = vector.broadcast %238 : f32 to vector<4x128xf32>
    %240 = arith.mulf %237, %239 : vector<4x128xf32>
    %c0_190 = arith.constant 0 : index
    %c1_191 = arith.constant 1 : index
    %c0_192 = arith.constant 0 : index
    %c0_193 = arith.constant 0 : index
    %241 = vector.load %arg2[%c0_190, %c1_191, %c0_192, %c0_193] : memref<1x8x4x128xf32, #tpu.memory_space<vmem>>, vector<1x1x4x128xf32>
    %242 = vector.shape_cast %241 : vector<1x1x4x128xf32> to vector<4x128xf32>
    %c3_194 = arith.constant 3 : index
    %c1_195 = arith.constant 1 : index
    %243 = memref.load %arg3[%c3_194, %c1_195] : memref<8x8xf32, #tpu.memory_space<smem>>
    %244 = vector.broadcast %243 : f32 to vector<4x128xf32>
    %245 = arith.mulf %242, %244 : vector<4x128xf32>
    %246 = arith.addf %240, %245 : vector<4x128xf32>
    %c0_196 = arith.constant 0 : index
    %c2_197 = arith.constant 2 : index
    %c0_198 = arith.constant 0 : index
    %c0_199 = arith.constant 0 : index
    %247 = vector.load %arg2[%c0_196, %c2_197, %c0_198, %c0_199] : memref<1x8x4x128xf32, #tpu.memory_space<vmem>>, vector<1x1x4x128xf32>
    %248 = vector.shape_cast %247 : vector<1x1x4x128xf32> to vector<4x128xf32>
    %c3_200 = arith.constant 3 : index
    %c2_201 = arith.constant 2 : index
    %249 = memref.load %arg3[%c3_200, %c2_201] : memref<8x8xf32, #tpu.memory_space<smem>>
    %250 = vector.broadcast %249 : f32 to vector<4x128xf32>
    %251 = arith.mulf %248, %250 : vector<4x128xf32>
    %252 = arith.addf %246, %251 : vector<4x128xf32>
    %c0_202 = arith.constant 0 : index
    %c3_203 = arith.constant 3 : index
    %c0_204 = arith.constant 0 : index
    %c0_205 = arith.constant 0 : index
    %253 = vector.load %arg2[%c0_202, %c3_203, %c0_204, %c0_205] : memref<1x8x4x128xf32, #tpu.memory_space<vmem>>, vector<1x1x4x128xf32>
    %254 = vector.shape_cast %253 : vector<1x1x4x128xf32> to vector<4x128xf32>
    %c3_206 = arith.constant 3 : index
    %c3_207 = arith.constant 3 : index
    %255 = memref.load %arg3[%c3_206, %c3_207] : memref<8x8xf32, #tpu.memory_space<smem>>
    %256 = vector.broadcast %255 : f32 to vector<4x128xf32>
    %257 = arith.mulf %254, %256 : vector<4x128xf32>
    %258 = arith.addf %252, %257 : vector<4x128xf32>
    %c0_208 = arith.constant 0 : index
    %c4_209 = arith.constant 4 : index
    %c0_210 = arith.constant 0 : index
    %c0_211 = arith.constant 0 : index
    %259 = vector.load %arg2[%c0_208, %c4_209, %c0_210, %c0_211] : memref<1x8x4x128xf32, #tpu.memory_space<vmem>>, vector<1x1x4x128xf32>
    %260 = vector.shape_cast %259 : vector<1x1x4x128xf32> to vector<4x128xf32>
    %c3_212 = arith.constant 3 : index
    %c4_213 = arith.constant 4 : index
    %261 = memref.load %arg3[%c3_212, %c4_213] : memref<8x8xf32, #tpu.memory_space<smem>>
    %262 = vector.broadcast %261 : f32 to vector<4x128xf32>
    %263 = arith.mulf %260, %262 : vector<4x128xf32>
    %264 = arith.addf %258, %263 : vector<4x128xf32>
    %c0_214 = arith.constant 0 : index
    %c5_215 = arith.constant 5 : index
    %c0_216 = arith.constant 0 : index
    %c0_217 = arith.constant 0 : index
    %265 = vector.load %arg2[%c0_214, %c5_215, %c0_216, %c0_217] : memref<1x8x4x128xf32, #tpu.memory_space<vmem>>, vector<1x1x4x128xf32>
    %266 = vector.shape_cast %265 : vector<1x1x4x128xf32> to vector<4x128xf32>
    %c3_218 = arith.constant 3 : index
    %c5_219 = arith.constant 5 : index
    %267 = memref.load %arg3[%c3_218, %c5_219] : memref<8x8xf32, #tpu.memory_space<smem>>
    %268 = vector.broadcast %267 : f32 to vector<4x128xf32>
    %269 = arith.mulf %266, %268 : vector<4x128xf32>
    %270 = arith.addf %264, %269 : vector<4x128xf32>
    %c0_220 = arith.constant 0 : index
    %c6_221 = arith.constant 6 : index
    %c0_222 = arith.constant 0 : index
    %c0_223 = arith.constant 0 : index
    %271 = vector.load %arg2[%c0_220, %c6_221, %c0_222, %c0_223] : memref<1x8x4x128xf32, #tpu.memory_space<vmem>>, vector<1x1x4x128xf32>
    %272 = vector.shape_cast %271 : vector<1x1x4x128xf32> to vector<4x128xf32>
    %c3_224 = arith.constant 3 : index
    %c6_225 = arith.constant 6 : index
    %273 = memref.load %arg3[%c3_224, %c6_225] : memref<8x8xf32, #tpu.memory_space<smem>>
    %274 = vector.broadcast %273 : f32 to vector<4x128xf32>
    %275 = arith.mulf %272, %274 : vector<4x128xf32>
    %276 = arith.addf %270, %275 : vector<4x128xf32>
    %c0_226 = arith.constant 0 : index
    %c7_227 = arith.constant 7 : index
    %c0_228 = arith.constant 0 : index
    %c0_229 = arith.constant 0 : index
    %277 = vector.load %arg2[%c0_226, %c7_227, %c0_228, %c0_229] : memref<1x8x4x128xf32, #tpu.memory_space<vmem>>, vector<1x1x4x128xf32>
    %278 = vector.shape_cast %277 : vector<1x1x4x128xf32> to vector<4x128xf32>
    %c3_230 = arith.constant 3 : index
    %c7_231 = arith.constant 7 : index
    %279 = memref.load %arg3[%c3_230, %c7_231] : memref<8x8xf32, #tpu.memory_space<smem>>
    %280 = vector.broadcast %279 : f32 to vector<4x128xf32>
    %281 = arith.mulf %278, %280 : vector<4x128xf32>
    %282 = arith.addf %276, %281 : vector<4x128xf32>
    %c3_232 = arith.constant 3 : index
    %283 = memref.load %arg4[%c3_232] : memref<8xf32, #tpu.memory_space<smem>>
    %284 = vector.broadcast %283 : f32 to vector<4x128xf32>
    %285 = arith.addf %282, %284 : vector<4x128xf32>
    %cst_233 = arith.constant 0.000000e+00 : f32
    %286 = vector.broadcast %cst_233 : f32 to vector<4x128xf32>
    %287 = arith.maximumf %285, %286 : vector<4x128xf32>
    %c0_234 = arith.constant 0 : index
    %c3_235 = arith.constant 3 : index
    %c0_236 = arith.constant 0 : index
    %c0_237 = arith.constant 0 : index
    %288 = vector.load %arg2[%c0_234, %c3_235, %c0_236, %c0_237] : memref<1x8x4x128xf32, #tpu.memory_space<vmem>>, vector<1x1x4x128xf32>
    %289 = vector.shape_cast %288 : vector<1x1x4x128xf32> to vector<4x128xf32>
    %290 = arith.addf %289, %287 : vector<4x128xf32>
    %cst_238 = arith.constant dense<0.000000e+00> : vector<4xf32>
    %291 = vector.multi_reduction <add>, %290, %cst_238 [1] : vector<4x128xf32> to vector<4xf32>
    %292 = vector.shape_cast %291 : vector<4xf32> to vector<4x1xf32>
    %cst_239 = arith.constant 1.280000e+02 : f32
    %293 = vector.broadcast %cst_239 : f32 to vector<4x1xf32>
    %294 = arith.divf %292, %293 : vector<4x1xf32>
    %295 = vector.broadcast %294 : vector<4x1xf32> to vector<4x128xf32>
    %296 = arith.subf %290, %295 : vector<4x128xf32>
    %297 = arith.mulf %296, %296 : vector<4x128xf32>
    %cst_240 = arith.constant dense<0.000000e+00> : vector<4xf32>
    %298 = vector.multi_reduction <add>, %297, %cst_240 [1] : vector<4x128xf32> to vector<4xf32>
    %299 = vector.shape_cast %298 : vector<4xf32> to vector<4x1xf32>
    %cst_241 = arith.constant 1.280000e+02 : f32
    %300 = vector.broadcast %cst_241 : f32 to vector<4x1xf32>
    %301 = arith.divf %299, %300 : vector<4x1xf32>
    %cst_242 = arith.constant 9.99999974E-6 : f32
    %302 = vector.broadcast %cst_242 : f32 to vector<4x1xf32>
    %303 = arith.addf %301, %302 : vector<4x1xf32>
    %304 = math.rsqrt %303 : vector<4x1xf32>
    %305 = vector.broadcast %304 : vector<4x1xf32> to vector<4x128xf32>
    %306 = arith.mulf %296, %305 : vector<4x128xf32>
    %307 = vector.broadcast %0 : vector<1x128xf32> to vector<4x128xf32>
    %308 = arith.mulf %306, %307 : vector<4x128xf32>
    %309 = vector.broadcast %1 : vector<1x128xf32> to vector<4x128xf32>
    %310 = arith.addf %308, %309 : vector<4x128xf32>
    %c0_243 = arith.constant 0 : index
    %c3_244 = arith.constant 3 : index
    %c0_245 = arith.constant 0 : index
    %c0_246 = arith.constant 0 : index
    %311 = vector.load %arg7[%c0_243, %c3_244, %c0_245, %c0_246] : memref<1x8x4x128xf32, #tpu.memory_space<vmem>>, vector<1x1x4x128xf32>
    %312 = vector.shape_cast %311 : vector<1x1x4x128xf32> to vector<4x128xf32>
    %313 = vector.shape_cast %310 : vector<4x128xf32> to vector<1x1x4x128xf32>
    tpu.vector_store %arg7[%c0_243, %c3_244, %c0_245, %c0_246], %313 {strides = array<i32>} : memref<1x8x4x128xf32, #tpu.memory_space<vmem>>, vector<1x1x4x128xf32>,
    %c0_247 = arith.constant 0 : index
    %c0_248 = arith.constant 0 : index
    %c0_249 = arith.constant 0 : index
    %c0_250 = arith.constant 0 : index
    %314 = vector.load %arg2[%c0_247, %c0_248, %c0_249, %c0_250] : memref<1x8x4x128xf32, #tpu.memory_space<vmem>>, vector<1x1x4x128xf32>
    %315 = vector.shape_cast %314 : vector<1x1x4x128xf32> to vector<4x128xf32>
    %c4_251 = arith.constant 4 : index
    %c0_252 = arith.constant 0 : index
    %316 = memref.load %arg3[%c4_251, %c0_252] : memref<8x8xf32, #tpu.memory_space<smem>>
    %317 = vector.broadcast %316 : f32 to vector<4x128xf32>
    %318 = arith.mulf %315, %317 : vector<4x128xf32>
    %c0_253 = arith.constant 0 : index
    %c1_254 = arith.constant 1 : index
    %c0_255 = arith.constant 0 : index
    %c0_256 = arith.constant 0 : index
    %319 = vector.load %arg2[%c0_253, %c1_254, %c0_255, %c0_256] : memref<1x8x4x128xf32, #tpu.memory_space<vmem>>, vector<1x1x4x128xf32>
    %320 = vector.shape_cast %319 : vector<1x1x4x128xf32> to vector<4x128xf32>
    %c4_257 = arith.constant 4 : index
    %c1_258 = arith.constant 1 : index
    %321 = memref.load %arg3[%c4_257, %c1_258] : memref<8x8xf32, #tpu.memory_space<smem>>
    %322 = vector.broadcast %321 : f32 to vector<4x128xf32>
    %323 = arith.mulf %320, %322 : vector<4x128xf32>
    %324 = arith.addf %318, %323 : vector<4x128xf32>
    %c0_259 = arith.constant 0 : index
    %c2_260 = arith.constant 2 : index
    %c0_261 = arith.constant 0 : index
    %c0_262 = arith.constant 0 : index
    %325 = vector.load %arg2[%c0_259, %c2_260, %c0_261, %c0_262] : memref<1x8x4x128xf32, #tpu.memory_space<vmem>>, vector<1x1x4x128xf32>
    %326 = vector.shape_cast %325 : vector<1x1x4x128xf32> to vector<4x128xf32>
    %c4_263 = arith.constant 4 : index
    %c2_264 = arith.constant 2 : index
    %327 = memref.load %arg3[%c4_263, %c2_264] : memref<8x8xf32, #tpu.memory_space<smem>>
    %328 = vector.broadcast %327 : f32 to vector<4x128xf32>
    %329 = arith.mulf %326, %328 : vector<4x128xf32>
    %330 = arith.addf %324, %329 : vector<4x128xf32>
    %c0_265 = arith.constant 0 : index
    %c3_266 = arith.constant 3 : index
    %c0_267 = arith.constant 0 : index
    %c0_268 = arith.constant 0 : index
    %331 = vector.load %arg2[%c0_265, %c3_266, %c0_267, %c0_268] : memref<1x8x4x128xf32, #tpu.memory_space<vmem>>, vector<1x1x4x128xf32>
    %332 = vector.shape_cast %331 : vector<1x1x4x128xf32> to vector<4x128xf32>
    %c4_269 = arith.constant 4 : index
    %c3_270 = arith.constant 3 : index
    %333 = memref.load %arg3[%c4_269, %c3_270] : memref<8x8xf32, #tpu.memory_space<smem>>
    %334 = vector.broadcast %333 : f32 to vector<4x128xf32>
    %335 = arith.mulf %332, %334 : vector<4x128xf32>
    %336 = arith.addf %330, %335 : vector<4x128xf32>
    %c0_271 = arith.constant 0 : index
    %c4_272 = arith.constant 4 : index
    %c0_273 = arith.constant 0 : index
    %c0_274 = arith.constant 0 : index
    %337 = vector.load %arg2[%c0_271, %c4_272, %c0_273, %c0_274] : memref<1x8x4x128xf32, #tpu.memory_space<vmem>>, vector<1x1x4x128xf32>
    %338 = vector.shape_cast %337 : vector<1x1x4x128xf32> to vector<4x128xf32>
    %c4_275 = arith.constant 4 : index
    %c4_276 = arith.constant 4 : index
    %339 = memref.load %arg3[%c4_275, %c4_276] : memref<8x8xf32, #tpu.memory_space<smem>>
    %340 = vector.broadcast %339 : f32 to vector<4x128xf32>
    %341 = arith.mulf %338, %340 : vector<4x128xf32>
    %342 = arith.addf %336, %341 : vector<4x128xf32>
    %c0_277 = arith.constant 0 : index
    %c5_278 = arith.constant 5 : index
    %c0_279 = arith.constant 0 : index
    %c0_280 = arith.constant 0 : index
    %343 = vector.load %arg2[%c0_277, %c5_278, %c0_279, %c0_280] : memref<1x8x4x128xf32, #tpu.memory_space<vmem>>, vector<1x1x4x128xf32>
    %344 = vector.shape_cast %343 : vector<1x1x4x128xf32> to vector<4x128xf32>
    %c4_281 = arith.constant 4 : index
    %c5_282 = arith.constant 5 : index
    %345 = memref.load %arg3[%c4_281, %c5_282] : memref<8x8xf32, #tpu.memory_space<smem>>
    %346 = vector.broadcast %345 : f32 to vector<4x128xf32>
    %347 = arith.mulf %344, %346 : vector<4x128xf32>
    %348 = arith.addf %342, %347 : vector<4x128xf32>
    %c0_283 = arith.constant 0 : index
    %c6_284 = arith.constant 6 : index
    %c0_285 = arith.constant 0 : index
    %c0_286 = arith.constant 0 : index
    %349 = vector.load %arg2[%c0_283, %c6_284, %c0_285, %c0_286] : memref<1x8x4x128xf32, #tpu.memory_space<vmem>>, vector<1x1x4x128xf32>
    %350 = vector.shape_cast %349 : vector<1x1x4x128xf32> to vector<4x128xf32>
    %c4_287 = arith.constant 4 : index
    %c6_288 = arith.constant 6 : index
    %351 = memref.load %arg3[%c4_287, %c6_288] : memref<8x8xf32, #tpu.memory_space<smem>>
    %352 = vector.broadcast %351 : f32 to vector<4x128xf32>
    %353 = arith.mulf %350, %352 : vector<4x128xf32>
    %354 = arith.addf %348, %353 : vector<4x128xf32>
    %c0_289 = arith.constant 0 : index
    %c7_290 = arith.constant 7 : index
    %c0_291 = arith.constant 0 : index
    %c0_292 = arith.constant 0 : index
    %355 = vector.load %arg2[%c0_289, %c7_290, %c0_291, %c0_292] : memref<1x8x4x128xf32, #tpu.memory_space<vmem>>, vector<1x1x4x128xf32>
    %356 = vector.shape_cast %355 : vector<1x1x4x128xf32> to vector<4x128xf32>
    %c4_293 = arith.constant 4 : index
    %c7_294 = arith.constant 7 : index
    %357 = memref.load %arg3[%c4_293, %c7_294] : memref<8x8xf32, #tpu.memory_space<smem>>
    %358 = vector.broadcast %357 : f32 to vector<4x128xf32>
    %359 = arith.mulf %356, %358 : vector<4x128xf32>
    %360 = arith.addf %354, %359 : vector<4x128xf32>
    %c4_295 = arith.constant 4 : index
    %361 = memref.load %arg4[%c4_295] : memref<8xf32, #tpu.memory_space<smem>>
    %362 = vector.broadcast %361 : f32 to vector<4x128xf32>
    %363 = arith.addf %360, %362 : vector<4x128xf32>
    %cst_296 = arith.constant 0.000000e+00 : f32
    %364 = vector.broadcast %cst_296 : f32 to vector<4x128xf32>
    %365 = arith.maximumf %363, %364 : vector<4x128xf32>
    %c0_297 = arith.constant 0 : index
    %c4_298 = arith.constant 4 : index
    %c0_299 = arith.constant 0 : index
    %c0_300 = arith.constant 0 : index
    %366 = vector.load %arg2[%c0_297, %c4_298, %c0_299, %c0_300] : memref<1x8x4x128xf32, #tpu.memory_space<vmem>>, vector<1x1x4x128xf32>
    %367 = vector.shape_cast %366 : vector<1x1x4x128xf32> to vector<4x128xf32>
    %368 = arith.addf %367, %365 : vector<4x128xf32>
    %cst_301 = arith.constant dense<0.000000e+00> : vector<4xf32>
    %369 = vector.multi_reduction <add>, %368, %cst_301 [1] : vector<4x128xf32> to vector<4xf32>
    %370 = vector.shape_cast %369 : vector<4xf32> to vector<4x1xf32>
    %cst_302 = arith.constant 1.280000e+02 : f32
    %371 = vector.broadcast %cst_302 : f32 to vector<4x1xf32>
    %372 = arith.divf %370, %371 : vector<4x1xf32>
    %373 = vector.broadcast %372 : vector<4x1xf32> to vector<4x128xf32>
    %374 = arith.subf %368, %373 : vector<4x128xf32>
    %375 = arith.mulf %374, %374 : vector<4x128xf32>
    %cst_303 = arith.constant dense<0.000000e+00> : vector<4xf32>
    %376 = vector.multi_reduction <add>, %375, %cst_303 [1] : vector<4x128xf32> to vector<4xf32>
    %377 = vector.shape_cast %376 : vector<4xf32> to vector<4x1xf32>
    %cst_304 = arith.constant 1.280000e+02 : f32
    %378 = vector.broadcast %cst_304 : f32 to vector<4x1xf32>
    %379 = arith.divf %377, %378 : vector<4x1xf32>
    %cst_305 = arith.constant 9.99999974E-6 : f32
    %380 = vector.broadcast %cst_305 : f32 to vector<4x1xf32>
    %381 = arith.addf %379, %380 : vector<4x1xf32>
    %382 = math.rsqrt %381 : vector<4x1xf32>
    %383 = vector.broadcast %382 : vector<4x1xf32> to vector<4x128xf32>
    %384 = arith.mulf %374, %383 : vector<4x128xf32>
    %385 = vector.broadcast %0 : vector<1x128xf32> to vector<4x128xf32>
    %386 = arith.mulf %384, %385 : vector<4x128xf32>
    %387 = vector.broadcast %1 : vector<1x128xf32> to vector<4x128xf32>
    %388 = arith.addf %386, %387 : vector<4x128xf32>
    %c0_306 = arith.constant 0 : index
    %c4_307 = arith.constant 4 : index
    %c0_308 = arith.constant 0 : index
    %c0_309 = arith.constant 0 : index
    %389 = vector.load %arg7[%c0_306, %c4_307, %c0_308, %c0_309] : memref<1x8x4x128xf32, #tpu.memory_space<vmem>>, vector<1x1x4x128xf32>
    %390 = vector.shape_cast %389 : vector<1x1x4x128xf32> to vector<4x128xf32>
    %391 = vector.shape_cast %388 : vector<4x128xf32> to vector<1x1x4x128xf32>
    tpu.vector_store %arg7[%c0_306, %c4_307, %c0_308, %c0_309], %391 {strides = array<i32>} : memref<1x8x4x128xf32, #tpu.memory_space<vmem>>, vector<1x1x4x128xf32>,
    %c0_310 = arith.constant 0 : index
    %c0_311 = arith.constant 0 : index
    %c0_312 = arith.constant 0 : index
    %c0_313 = arith.constant 0 : index
    %392 = vector.load %arg2[%c0_310, %c0_311, %c0_312, %c0_313] : memref<1x8x4x128xf32, #tpu.memory_space<vmem>>, vector<1x1x4x128xf32>
    %393 = vector.shape_cast %392 : vector<1x1x4x128xf32> to vector<4x128xf32>
    %c5_314 = arith.constant 5 : index
    %c0_315 = arith.constant 0 : index
    %394 = memref.load %arg3[%c5_314, %c0_315] : memref<8x8xf32, #tpu.memory_space<smem>>
    %395 = vector.broadcast %394 : f32 to vector<4x128xf32>
    %396 = arith.mulf %393, %395 : vector<4x128xf32>
    %c0_316 = arith.constant 0 : index
    %c1_317 = arith.constant 1 : index
    %c0_318 = arith.constant 0 : index
    %c0_319 = arith.constant 0 : index
    %397 = vector.load %arg2[%c0_316, %c1_317, %c0_318, %c0_319] : memref<1x8x4x128xf32, #tpu.memory_space<vmem>>, vector<1x1x4x128xf32>
    %398 = vector.shape_cast %397 : vector<1x1x4x128xf32> to vector<4x128xf32>
    %c5_320 = arith.constant 5 : index
    %c1_321 = arith.constant 1 : index
    %399 = memref.load %arg3[%c5_320, %c1_321] : memref<8x8xf32, #tpu.memory_space<smem>>
    %400 = vector.broadcast %399 : f32 to vector<4x128xf32>
    %401 = arith.mulf %398, %400 : vector<4x128xf32>
    %402 = arith.addf %396, %401 : vector<4x128xf32>
    %c0_322 = arith.constant 0 : index
    %c2_323 = arith.constant 2 : index
    %c0_324 = arith.constant 0 : index
    %c0_325 = arith.constant 0 : index
    %403 = vector.load %arg2[%c0_322, %c2_323, %c0_324, %c0_325] : memref<1x8x4x128xf32, #tpu.memory_space<vmem>>, vector<1x1x4x128xf32>
    %404 = vector.shape_cast %403 : vector<1x1x4x128xf32> to vector<4x128xf32>
    %c5_326 = arith.constant 5 : index
    %c2_327 = arith.constant 2 : index
    %405 = memref.load %arg3[%c5_326, %c2_327] : memref<8x8xf32, #tpu.memory_space<smem>>
    %406 = vector.broadcast %405 : f32 to vector<4x128xf32>
    %407 = arith.mulf %404, %406 : vector<4x128xf32>
    %408 = arith.addf %402, %407 : vector<4x128xf32>
    %c0_328 = arith.constant 0 : index
    %c3_329 = arith.constant 3 : index
    %c0_330 = arith.constant 0 : index
    %c0_331 = arith.constant 0 : index
    %409 = vector.load %arg2[%c0_328, %c3_329, %c0_330, %c0_331] : memref<1x8x4x128xf32, #tpu.memory_space<vmem>>, vector<1x1x4x128xf32>
    %410 = vector.shape_cast %409 : vector<1x1x4x128xf32> to vector<4x128xf32>
    %c5_332 = arith.constant 5 : index
    %c3_333 = arith.constant 3 : index
    %411 = memref.load %arg3[%c5_332, %c3_333] : memref<8x8xf32, #tpu.memory_space<smem>>
    %412 = vector.broadcast %411 : f32 to vector<4x128xf32>
    %413 = arith.mulf %410, %412 : vector<4x128xf32>
    %414 = arith.addf %408, %413 : vector<4x128xf32>
    %c0_334 = arith.constant 0 : index
    %c4_335 = arith.constant 4 : index
    %c0_336 = arith.constant 0 : index
    %c0_337 = arith.constant 0 : index
    %415 = vector.load %arg2[%c0_334, %c4_335, %c0_336, %c0_337] : memref<1x8x4x128xf32, #tpu.memory_space<vmem>>, vector<1x1x4x128xf32>
    %416 = vector.shape_cast %415 : vector<1x1x4x128xf32> to vector<4x128xf32>
    %c5_338 = arith.constant 5 : index
    %c4_339 = arith.constant 4 : index
    %417 = memref.load %arg3[%c5_338, %c4_339] : memref<8x8xf32, #tpu.memory_space<smem>>
    %418 = vector.broadcast %417 : f32 to vector<4x128xf32>
    %419 = arith.mulf %416, %418 : vector<4x128xf32>
    %420 = arith.addf %414, %419 : vector<4x128xf32>
    %c0_340 = arith.constant 0 : index
    %c5_341 = arith.constant 5 : index
    %c0_342 = arith.constant 0 : index
    %c0_343 = arith.constant 0 : index
    %421 = vector.load %arg2[%c0_340, %c5_341, %c0_342, %c0_343] : memref<1x8x4x128xf32, #tpu.memory_space<vmem>>, vector<1x1x4x128xf32>
    %422 = vector.shape_cast %421 : vector<1x1x4x128xf32> to vector<4x128xf32>
    %c5_344 = arith.constant 5 : index
    %c5_345 = arith.constant 5 : index
    %423 = memref.load %arg3[%c5_344, %c5_345] : memref<8x8xf32, #tpu.memory_space<smem>>
    %424 = vector.broadcast %423 : f32 to vector<4x128xf32>
    %425 = arith.mulf %422, %424 : vector<4x128xf32>
    %426 = arith.addf %420, %425 : vector<4x128xf32>
    %c0_346 = arith.constant 0 : index
    %c6_347 = arith.constant 6 : index
    %c0_348 = arith.constant 0 : index
    %c0_349 = arith.constant 0 : index
    %427 = vector.load %arg2[%c0_346, %c6_347, %c0_348, %c0_349] : memref<1x8x4x128xf32, #tpu.memory_space<vmem>>, vector<1x1x4x128xf32>
    %428 = vector.shape_cast %427 : vector<1x1x4x128xf32> to vector<4x128xf32>
    %c5_350 = arith.constant 5 : index
    %c6_351 = arith.constant 6 : index
    %429 = memref.load %arg3[%c5_350, %c6_351] : memref<8x8xf32, #tpu.memory_space<smem>>
    %430 = vector.broadcast %429 : f32 to vector<4x128xf32>
    %431 = arith.mulf %428, %430 : vector<4x128xf32>
    %432 = arith.addf %426, %431 : vector<4x128xf32>
    %c0_352 = arith.constant 0 : index
    %c7_353 = arith.constant 7 : index
    %c0_354 = arith.constant 0 : index
    %c0_355 = arith.constant 0 : index
    %433 = vector.load %arg2[%c0_352, %c7_353, %c0_354, %c0_355] : memref<1x8x4x128xf32, #tpu.memory_space<vmem>>, vector<1x1x4x128xf32>
    %434 = vector.shape_cast %433 : vector<1x1x4x128xf32> to vector<4x128xf32>
    %c5_356 = arith.constant 5 : index
    %c7_357 = arith.constant 7 : index
    %435 = memref.load %arg3[%c5_356, %c7_357] : memref<8x8xf32, #tpu.memory_space<smem>>
    %436 = vector.broadcast %435 : f32 to vector<4x128xf32>
    %437 = arith.mulf %434, %436 : vector<4x128xf32>
    %438 = arith.addf %432, %437 : vector<4x128xf32>
    %c5_358 = arith.constant 5 : index
    %439 = memref.load %arg4[%c5_358] : memref<8xf32, #tpu.memory_space<smem>>
    %440 = vector.broadcast %439 : f32 to vector<4x128xf32>
    %441 = arith.addf %438, %440 : vector<4x128xf32>
    %cst_359 = arith.constant 0.000000e+00 : f32
    %442 = vector.broadcast %cst_359 : f32 to vector<4x128xf32>
    %443 = arith.maximumf %441, %442 : vector<4x128xf32>
    %c0_360 = arith.constant 0 : index
    %c5_361 = arith.constant 5 : index
    %c0_362 = arith.constant 0 : index
    %c0_363 = arith.constant 0 : index
    %444 = vector.load %arg2[%c0_360, %c5_361, %c0_362, %c0_363] : memref<1x8x4x128xf32, #tpu.memory_space<vmem>>, vector<1x1x4x128xf32>
    %445 = vector.shape_cast %444 : vector<1x1x4x128xf32> to vector<4x128xf32>
    %446 = arith.addf %445, %443 : vector<4x128xf32>
    %cst_364 = arith.constant dense<0.000000e+00> : vector<4xf32>
    %447 = vector.multi_reduction <add>, %446, %cst_364 [1] : vector<4x128xf32> to vector<4xf32>
    %448 = vector.shape_cast %447 : vector<4xf32> to vector<4x1xf32>
    %cst_365 = arith.constant 1.280000e+02 : f32
    %449 = vector.broadcast %cst_365 : f32 to vector<4x1xf32>
    %450 = arith.divf %448, %449 : vector<4x1xf32>
    %451 = vector.broadcast %450 : vector<4x1xf32> to vector<4x128xf32>
    %452 = arith.subf %446, %451 : vector<4x128xf32>
    %453 = arith.mulf %452, %452 : vector<4x128xf32>
    %cst_366 = arith.constant dense<0.000000e+00> : vector<4xf32>
    %454 = vector.multi_reduction <add>, %453, %cst_366 [1] : vector<4x128xf32> to vector<4xf32>
    %455 = vector.shape_cast %454 : vector<4xf32> to vector<4x1xf32>
    %cst_367 = arith.constant 1.280000e+02 : f32
    %456 = vector.broadcast %cst_367 : f32 to vector<4x1xf32>
    %457 = arith.divf %455, %456 : vector<4x1xf32>
    %cst_368 = arith.constant 9.99999974E-6 : f32
    %458 = vector.broadcast %cst_368 : f32 to vector<4x1xf32>
    %459 = arith.addf %457, %458 : vector<4x1xf32>
    %460 = math.rsqrt %459 : vector<4x1xf32>
    %461 = vector.broadcast %460 : vector<4x1xf32> to vector<4x128xf32>
    %462 = arith.mulf %452, %461 : vector<4x128xf32>
    %463 = vector.broadcast %0 : vector<1x128xf32> to vector<4x128xf32>
    %464 = arith.mulf %462, %463 : vector<4x128xf32>
    %465 = vector.broadcast %1 : vector<1x128xf32> to vector<4x128xf32>
    %466 = arith.addf %464, %465 : vector<4x128xf32>
    %c0_369 = arith.constant 0 : index
    %c5_370 = arith.constant 5 : index
    %c0_371 = arith.constant 0 : index
    %c0_372 = arith.constant 0 : index
    %467 = vector.load %arg7[%c0_369, %c5_370, %c0_371, %c0_372] : memref<1x8x4x128xf32, #tpu.memory_space<vmem>>, vector<1x1x4x128xf32>
    %468 = vector.shape_cast %467 : vector<1x1x4x128xf32> to vector<4x128xf32>
    %469 = vector.shape_cast %466 : vector<4x128xf32> to vector<1x1x4x128xf32>
    tpu.vector_store %arg7[%c0_369, %c5_370, %c0_371, %c0_372], %469 {strides = array<i32>} : memref<1x8x4x128xf32, #tpu.memory_space<vmem>>, vector<1x1x4x128xf32>,
    %c0_373 = arith.constant 0 : index
    %c0_374 = arith.constant 0 : index
    %c0_375 = arith.constant 0 : index
    %c0_376 = arith.constant 0 : index
    %470 = vector.load %arg2[%c0_373, %c0_374, %c0_375, %c0_376] : memref<1x8x4x128xf32, #tpu.memory_space<vmem>>, vector<1x1x4x128xf32>
    %471 = vector.shape_cast %470 : vector<1x1x4x128xf32> to vector<4x128xf32>
    %c6_377 = arith.constant 6 : index
    %c0_378 = arith.constant 0 : index
    %472 = memref.load %arg3[%c6_377, %c0_378] : memref<8x8xf32, #tpu.memory_space<smem>>
    %473 = vector.broadcast %472 : f32 to vector<4x128xf32>
    %474 = arith.mulf %471, %473 : vector<4x128xf32>
    %c0_379 = arith.constant 0 : index
    %c1_380 = arith.constant 1 : index
    %c0_381 = arith.constant 0 : index
    %c0_382 = arith.constant 0 : index
    %475 = vector.load %arg2[%c0_379, %c1_380, %c0_381, %c0_382] : memref<1x8x4x128xf32, #tpu.memory_space<vmem>>, vector<1x1x4x128xf32>
    %476 = vector.shape_cast %475 : vector<1x1x4x128xf32> to vector<4x128xf32>
    %c6_383 = arith.constant 6 : index
    %c1_384 = arith.constant 1 : index
    %477 = memref.load %arg3[%c6_383, %c1_384] : memref<8x8xf32, #tpu.memory_space<smem>>
    %478 = vector.broadcast %477 : f32 to vector<4x128xf32>
    %479 = arith.mulf %476, %478 : vector<4x128xf32>
    %480 = arith.addf %474, %479 : vector<4x128xf32>
    %c0_385 = arith.constant 0 : index
    %c2_386 = arith.constant 2 : index
    %c0_387 = arith.constant 0 : index
    %c0_388 = arith.constant 0 : index
    %481 = vector.load %arg2[%c0_385, %c2_386, %c0_387, %c0_388] : memref<1x8x4x128xf32, #tpu.memory_space<vmem>>, vector<1x1x4x128xf32>
    %482 = vector.shape_cast %481 : vector<1x1x4x128xf32> to vector<4x128xf32>
    %c6_389 = arith.constant 6 : index
    %c2_390 = arith.constant 2 : index
    %483 = memref.load %arg3[%c6_389, %c2_390] : memref<8x8xf32, #tpu.memory_space<smem>>
    %484 = vector.broadcast %483 : f32 to vector<4x128xf32>
    %485 = arith.mulf %482, %484 : vector<4x128xf32>
    %486 = arith.addf %480, %485 : vector<4x128xf32>
    %c0_391 = arith.constant 0 : index
    %c3_392 = arith.constant 3 : index
    %c0_393 = arith.constant 0 : index
    %c0_394 = arith.constant 0 : index
    %487 = vector.load %arg2[%c0_391, %c3_392, %c0_393, %c0_394] : memref<1x8x4x128xf32, #tpu.memory_space<vmem>>, vector<1x1x4x128xf32>
    %488 = vector.shape_cast %487 : vector<1x1x4x128xf32> to vector<4x128xf32>
    %c6_395 = arith.constant 6 : index
    %c3_396 = arith.constant 3 : index
    %489 = memref.load %arg3[%c6_395, %c3_396] : memref<8x8xf32, #tpu.memory_space<smem>>
    %490 = vector.broadcast %489 : f32 to vector<4x128xf32>
    %491 = arith.mulf %488, %490 : vector<4x128xf32>
    %492 = arith.addf %486, %491 : vector<4x128xf32>
    %c0_397 = arith.constant 0 : index
    %c4_398 = arith.constant 4 : index
    %c0_399 = arith.constant 0 : index
    %c0_400 = arith.constant 0 : index
    %493 = vector.load %arg2[%c0_397, %c4_398, %c0_399, %c0_400] : memref<1x8x4x128xf32, #tpu.memory_space<vmem>>, vector<1x1x4x128xf32>
    %494 = vector.shape_cast %493 : vector<1x1x4x128xf32> to vector<4x128xf32>
    %c6_401 = arith.constant 6 : index
    %c4_402 = arith.constant 4 : index
    %495 = memref.load %arg3[%c6_401, %c4_402] : memref<8x8xf32, #tpu.memory_space<smem>>
    %496 = vector.broadcast %495 : f32 to vector<4x128xf32>
    %497 = arith.mulf %494, %496 : vector<4x128xf32>
    %498 = arith.addf %492, %497 : vector<4x128xf32>
    %c0_403 = arith.constant 0 : index
    %c5_404 = arith.constant 5 : index
    %c0_405 = arith.constant 0 : index
    %c0_406 = arith.constant 0 : index
    %499 = vector.load %arg2[%c0_403, %c5_404, %c0_405, %c0_406] : memref<1x8x4x128xf32, #tpu.memory_space<vmem>>, vector<1x1x4x128xf32>
    %500 = vector.shape_cast %499 : vector<1x1x4x128xf32> to vector<4x128xf32>
    %c6_407 = arith.constant 6 : index
    %c5_408 = arith.constant 5 : index
    %501 = memref.load %arg3[%c6_407, %c5_408] : memref<8x8xf32, #tpu.memory_space<smem>>
    %502 = vector.broadcast %501 : f32 to vector<4x128xf32>
    %503 = arith.mulf %500, %502 : vector<4x128xf32>
    %504 = arith.addf %498, %503 : vector<4x128xf32>
    %c0_409 = arith.constant 0 : index
    %c6_410 = arith.constant 6 : index
    %c0_411 = arith.constant 0 : index
    %c0_412 = arith.constant 0 : index
    %505 = vector.load %arg2[%c0_409, %c6_410, %c0_411, %c0_412] : memref<1x8x4x128xf32, #tpu.memory_space<vmem>>, vector<1x1x4x128xf32>
    %506 = vector.shape_cast %505 : vector<1x1x4x128xf32> to vector<4x128xf32>
    %c6_413 = arith.constant 6 : index
    %c6_414 = arith.constant 6 : index
    %507 = memref.load %arg3[%c6_413, %c6_414] : memref<8x8xf32, #tpu.memory_space<smem>>
    %508 = vector.broadcast %507 : f32 to vector<4x128xf32>
    %509 = arith.mulf %506, %508 : vector<4x128xf32>
    %510 = arith.addf %504, %509 : vector<4x128xf32>
    %c0_415 = arith.constant 0 : index
    %c7_416 = arith.constant 7 : index
    %c0_417 = arith.constant 0 : index
    %c0_418 = arith.constant 0 : index
    %511 = vector.load %arg2[%c0_415, %c7_416, %c0_417, %c0_418] : memref<1x8x4x128xf32, #tpu.memory_space<vmem>>, vector<1x1x4x128xf32>
    %512 = vector.shape_cast %511 : vector<1x1x4x128xf32> to vector<4x128xf32>
    %c6_419 = arith.constant 6 : index
    %c7_420 = arith.constant 7 : index
    %513 = memref.load %arg3[%c6_419, %c7_420] : memref<8x8xf32, #tpu.memory_space<smem>>
    %514 = vector.broadcast %513 : f32 to vector<4x128xf32>
    %515 = arith.mulf %512, %514 : vector<4x128xf32>
    %516 = arith.addf %510, %515 : vector<4x128xf32>
    %c6_421 = arith.constant 6 : index
    %517 = memref.load %arg4[%c6_421] : memref<8xf32, #tpu.memory_space<smem>>
    %518 = vector.broadcast %517 : f32 to vector<4x128xf32>
    %519 = arith.addf %516, %518 : vector<4x128xf32>
    %cst_422 = arith.constant 0.000000e+00 : f32
    %520 = vector.broadcast %cst_422 : f32 to vector<4x128xf32>
    %521 = arith.maximumf %519, %520 : vector<4x128xf32>
    %c0_423 = arith.constant 0 : index
    %c6_424 = arith.constant 6 : index
    %c0_425 = arith.constant 0 : index
    %c0_426 = arith.constant 0 : index
    %522 = vector.load %arg2[%c0_423, %c6_424, %c0_425, %c0_426] : memref<1x8x4x128xf32, #tpu.memory_space<vmem>>, vector<1x1x4x128xf32>
    %523 = vector.shape_cast %522 : vector<1x1x4x128xf32> to vector<4x128xf32>
    %524 = arith.addf %523, %521 : vector<4x128xf32>
    %cst_427 = arith.constant dense<0.000000e+00> : vector<4xf32>
    %525 = vector.multi_reduction <add>, %524, %cst_427 [1] : vector<4x128xf32> to vector<4xf32>
    %526 = vector.shape_cast %525 : vector<4xf32> to vector<4x1xf32>
    %cst_428 = arith.constant 1.280000e+02 : f32
    %527 = vector.broadcast %cst_428 : f32 to vector<4x1xf32>
    %528 = arith.divf %526, %527 : vector<4x1xf32>
    %529 = vector.broadcast %528 : vector<4x1xf32> to vector<4x128xf32>
    %530 = arith.subf %524, %529 : vector<4x128xf32>
    %531 = arith.mulf %530, %530 : vector<4x128xf32>
    %cst_429 = arith.constant dense<0.000000e+00> : vector<4xf32>
    %532 = vector.multi_reduction <add>, %531, %cst_429 [1] : vector<4x128xf32> to vector<4xf32>
    %533 = vector.shape_cast %532 : vector<4xf32> to vector<4x1xf32>
    %cst_430 = arith.constant 1.280000e+02 : f32
    %534 = vector.broadcast %cst_430 : f32 to vector<4x1xf32>
    %535 = arith.divf %533, %534 : vector<4x1xf32>
    %cst_431 = arith.constant 9.99999974E-6 : f32
    %536 = vector.broadcast %cst_431 : f32 to vector<4x1xf32>
    %537 = arith.addf %535, %536 : vector<4x1xf32>
    %538 = math.rsqrt %537 : vector<4x1xf32>
    %539 = vector.broadcast %538 : vector<4x1xf32> to vector<4x128xf32>
    %540 = arith.mulf %530, %539 : vector<4x128xf32>
    %541 = vector.broadcast %0 : vector<1x128xf32> to vector<4x128xf32>
    %542 = arith.mulf %540, %541 : vector<4x128xf32>
    %543 = vector.broadcast %1 : vector<1x128xf32> to vector<4x128xf32>
    %544 = arith.addf %542, %543 : vector<4x128xf32>
    %c0_432 = arith.constant 0 : index
    %c6_433 = arith.constant 6 : index
    %c0_434 = arith.constant 0 : index
    %c0_435 = arith.constant 0 : index
    %545 = vector.load %arg7[%c0_432, %c6_433, %c0_434, %c0_435] : memref<1x8x4x128xf32, #tpu.memory_space<vmem>>, vector<1x1x4x128xf32>
    %546 = vector.shape_cast %545 : vector<1x1x4x128xf32> to vector<4x128xf32>
    %547 = vector.shape_cast %544 : vector<4x128xf32> to vector<1x1x4x128xf32>
    tpu.vector_store %arg7[%c0_432, %c6_433, %c0_434, %c0_435], %547 {strides = array<i32>} : memref<1x8x4x128xf32, #tpu.memory_space<vmem>>, vector<1x1x4x128xf32>,
    %c0_436 = arith.constant 0 : index
    %c0_437 = arith.constant 0 : index
    %c0_438 = arith.constant 0 : index
    %c0_439 = arith.constant 0 : index
    %548 = vector.load %arg2[%c0_436, %c0_437, %c0_438, %c0_439] : memref<1x8x4x128xf32, #tpu.memory_space<vmem>>, vector<1x1x4x128xf32>
    %549 = vector.shape_cast %548 : vector<1x1x4x128xf32> to vector<4x128xf32>
    %c7_440 = arith.constant 7 : index
    %c0_441 = arith.constant 0 : index
    %550 = memref.load %arg3[%c7_440, %c0_441] : memref<8x8xf32, #tpu.memory_space<smem>>
    %551 = vector.broadcast %550 : f32 to vector<4x128xf32>
    %552 = arith.mulf %549, %551 : vector<4x128xf32>
    %c0_442 = arith.constant 0 : index
    %c1_443 = arith.constant 1 : index
    %c0_444 = arith.constant 0 : index
    %c0_445 = arith.constant 0 : index
    %553 = vector.load %arg2[%c0_442, %c1_443, %c0_444, %c0_445] : memref<1x8x4x128xf32, #tpu.memory_space<vmem>>, vector<1x1x4x128xf32>
    %554 = vector.shape_cast %553 : vector<1x1x4x128xf32> to vector<4x128xf32>
    %c7_446 = arith.constant 7 : index
    %c1_447 = arith.constant 1 : index
    %555 = memref.load %arg3[%c7_446, %c1_447] : memref<8x8xf32, #tpu.memory_space<smem>>
    %556 = vector.broadcast %555 : f32 to vector<4x128xf32>
    %557 = arith.mulf %554, %556 : vector<4x128xf32>
    %558 = arith.addf %552, %557 : vector<4x128xf32>
    %c0_448 = arith.constant 0 : index
    %c2_449 = arith.constant 2 : index
    %c0_450 = arith.constant 0 : index
    %c0_451 = arith.constant 0 : index
    %559 = vector.load %arg2[%c0_448, %c2_449, %c0_450, %c0_451] : memref<1x8x4x128xf32, #tpu.memory_space<vmem>>, vector<1x1x4x128xf32>
    %560 = vector.shape_cast %559 : vector<1x1x4x128xf32> to vector<4x128xf32>
    %c7_452 = arith.constant 7 : index
    %c2_453 = arith.constant 2 : index
    %561 = memref.load %arg3[%c7_452, %c2_453] : memref<8x8xf32, #tpu.memory_space<smem>>
    %562 = vector.broadcast %561 : f32 to vector<4x128xf32>
    %563 = arith.mulf %560, %562 : vector<4x128xf32>
    %564 = arith.addf %558, %563 : vector<4x128xf32>
    %c0_454 = arith.constant 0 : index
    %c3_455 = arith.constant 3 : index
    %c0_456 = arith.constant 0 : index
    %c0_457 = arith.constant 0 : index
    %565 = vector.load %arg2[%c0_454, %c3_455, %c0_456, %c0_457] : memref<1x8x4x128xf32, #tpu.memory_space<vmem>>, vector<1x1x4x128xf32>
    %566 = vector.shape_cast %565 : vector<1x1x4x128xf32> to vector<4x128xf32>
    %c7_458 = arith.constant 7 : index
    %c3_459 = arith.constant 3 : index
    %567 = memref.load %arg3[%c7_458, %c3_459] : memref<8x8xf32, #tpu.memory_space<smem>>
    %568 = vector.broadcast %567 : f32 to vector<4x128xf32>
    %569 = arith.mulf %566, %568 : vector<4x128xf32>
    %570 = arith.addf %564, %569 : vector<4x128xf32>
    %c0_460 = arith.constant 0 : index
    %c4_461 = arith.constant 4 : index
    %c0_462 = arith.constant 0 : index
    %c0_463 = arith.constant 0 : index
    %571 = vector.load %arg2[%c0_460, %c4_461, %c0_462, %c0_463] : memref<1x8x4x128xf32, #tpu.memory_space<vmem>>, vector<1x1x4x128xf32>
    %572 = vector.shape_cast %571 : vector<1x1x4x128xf32> to vector<4x128xf32>
    %c7_464 = arith.constant 7 : index
    %c4_465 = arith.constant 4 : index
    %573 = memref.load %arg3[%c7_464, %c4_465] : memref<8x8xf32, #tpu.memory_space<smem>>
    %574 = vector.broadcast %573 : f32 to vector<4x128xf32>
    %575 = arith.mulf %572, %574 : vector<4x128xf32>
    %576 = arith.addf %570, %575 : vector<4x128xf32>
    %c0_466 = arith.constant 0 : index
    %c5_467 = arith.constant 5 : index
    %c0_468 = arith.constant 0 : index
    %c0_469 = arith.constant 0 : index
    %577 = vector.load %arg2[%c0_466, %c5_467, %c0_468, %c0_469] : memref<1x8x4x128xf32, #tpu.memory_space<vmem>>, vector<1x1x4x128xf32>
    %578 = vector.shape_cast %577 : vector<1x1x4x128xf32> to vector<4x128xf32>
    %c7_470 = arith.constant 7 : index
    %c5_471 = arith.constant 5 : index
    %579 = memref.load %arg3[%c7_470, %c5_471] : memref<8x8xf32, #tpu.memory_space<smem>>
    %580 = vector.broadcast %579 : f32 to vector<4x128xf32>
    %581 = arith.mulf %578, %580 : vector<4x128xf32>
    %582 = arith.addf %576, %581 : vector<4x128xf32>
    %c0_472 = arith.constant 0 : index
    %c6_473 = arith.constant 6 : index
    %c0_474 = arith.constant 0 : index
    %c0_475 = arith.constant 0 : index
    %583 = vector.load %arg2[%c0_472, %c6_473, %c0_474, %c0_475] : memref<1x8x4x128xf32, #tpu.memory_space<vmem>>, vector<1x1x4x128xf32>
    %584 = vector.shape_cast %583 : vector<1x1x4x128xf32> to vector<4x128xf32>
    %c7_476 = arith.constant 7 : index
    %c6_477 = arith.constant 6 : index
    %585 = memref.load %arg3[%c7_476, %c6_477] : memref<8x8xf32, #tpu.memory_space<smem>>
    %586 = vector.broadcast %585 : f32 to vector<4x128xf32>
    %587 = arith.mulf %584, %586 : vector<4x128xf32>
    %588 = arith.addf %582, %587 : vector<4x128xf32>
    %c0_478 = arith.constant 0 : index
    %c7_479 = arith.constant 7 : index
    %c0_480 = arith.constant 0 : index
    %c0_481 = arith.constant 0 : index
    %589 = vector.load %arg2[%c0_478, %c7_479, %c0_480, %c0_481] : memref<1x8x4x128xf32, #tpu.memory_space<vmem>>, vector<1x1x4x128xf32>
    %590 = vector.shape_cast %589 : vector<1x1x4x128xf32> to vector<4x128xf32>
    %c7_482 = arith.constant 7 : index
    %c7_483 = arith.constant 7 : index
    %591 = memref.load %arg3[%c7_482, %c7_483] : memref<8x8xf32, #tpu.memory_space<smem>>
    %592 = vector.broadcast %591 : f32 to vector<4x128xf32>
    %593 = arith.mulf %590, %592 : vector<4x128xf32>
    %594 = arith.addf %588, %593 : vector<4x128xf32>
    %c7_484 = arith.constant 7 : index
    %595 = memref.load %arg4[%c7_484] : memref<8xf32, #tpu.memory_space<smem>>
    %596 = vector.broadcast %595 : f32 to vector<4x128xf32>
    %597 = arith.addf %594, %596 : vector<4x128xf32>
    %cst_485 = arith.constant 0.000000e+00 : f32
    %598 = vector.broadcast %cst_485 : f32 to vector<4x128xf32>
    %599 = arith.maximumf %597, %598 : vector<4x128xf32>
    %c0_486 = arith.constant 0 : index
    %c7_487 = arith.constant 7 : index
    %c0_488 = arith.constant 0 : index
    %c0_489 = arith.constant 0 : index
    %600 = vector.load %arg2[%c0_486, %c7_487, %c0_488, %c0_489] : memref<1x8x4x128xf32, #tpu.memory_space<vmem>>, vector<1x1x4x128xf32>
    %601 = vector.shape_cast %600 : vector<1x1x4x128xf32> to vector<4x128xf32>
    %602 = arith.addf %601, %599 : vector<4x128xf32>
    %cst_490 = arith.constant dense<0.000000e+00> : vector<4xf32>
    %603 = vector.multi_reduction <add>, %602, %cst_490 [1] : vector<4x128xf32> to vector<4xf32>
    %604 = vector.shape_cast %603 : vector<4xf32> to vector<4x1xf32>
    %cst_491 = arith.constant 1.280000e+02 : f32
    %605 = vector.broadcast %cst_491 : f32 to vector<4x1xf32>
    %606 = arith.divf %604, %605 : vector<4x1xf32>
    %607 = vector.broadcast %606 : vector<4x1xf32> to vector<4x128xf32>
    %608 = arith.subf %602, %607 : vector<4x128xf32>
    %609 = arith.mulf %608, %608 : vector<4x128xf32>
    %cst_492 = arith.constant dense<0.000000e+00> : vector<4xf32>
    %610 = vector.multi_reduction <add>, %609, %cst_492 [1] : vector<4x128xf32> to vector<4xf32>
    %611 = vector.shape_cast %610 : vector<4xf32> to vector<4x1xf32>
    %cst_493 = arith.constant 1.280000e+02 : f32
    %612 = vector.broadcast %cst_493 : f32 to vector<4x1xf32>
    %613 = arith.divf %611, %612 : vector<4x1xf32>
    %cst_494 = arith.constant 9.99999974E-6 : f32
    %614 = vector.broadcast %cst_494 : f32 to vector<4x1xf32>
    %615 = arith.addf %613, %614 : vector<4x1xf32>
    %616 = math.rsqrt %615 : vector<4x1xf32>
    %617 = vector.broadcast %616 : vector<4x1xf32> to vector<4x128xf32>
    %618 = arith.mulf %608, %617 : vector<4x128xf32>
    %619 = vector.broadcast %0 : vector<1x128xf32> to vector<4x128xf32>
    %620 = arith.mulf %618, %619 : vector<4x128xf32>
    %621 = vector.broadcast %1 : vector<1x128xf32> to vector<4x128xf32>
    %622 = arith.addf %620, %621 : vector<4x128xf32>
    %c0_495 = arith.constant 0 : index
    %c7_496 = arith.constant 7 : index
    %c0_497 = arith.constant 0 : index
    %c0_498 = arith.constant 0 : index
    %623 = vector.load %arg7[%c0_495, %c7_496, %c0_497, %c0_498] : memref<1x8x4x128xf32, #tpu.memory_space<vmem>>, vector<1x1x4x128xf32>
    %624 = vector.shape_cast %623 : vector<1x1x4x128xf32> to vector<4x128xf32>
    %625 = vector.shape_cast %622 : vector<4x128xf32> to vector<1x1x4x128xf32>
    tpu.vector_store %arg7[%c0_495, %c7_496, %c0_497, %c0_498], %625 {strides = array<i32>} : memref<1x8x4x128xf32, #tpu.memory_space<vmem>>, vector<1x1x4x128xf32>,
    return
  }
  func.func @transform_0(%arg0: i32, %arg1: i32) -> (i32, i32, i32, i32) {
    %c0_i32 = arith.constant 0 : i32
    %c0_i32_0 = arith.constant 0 : i32
    %c0_i32_1 = arith.constant 0 : i32
    return %arg0, %c0_i32, %arg1, %c0_i32_0 : i32, i32, i32, i32
  }
  func.func @transform_1(%arg0: i32, %arg1: i32) -> (i32, i32) {
    %c0_i32 = arith.constant 0 : i32
    %c0_i32_0 = arith.constant 0 : i32
    %c0_i32_1 = arith.constant 0 : i32
    return %c0_i32, %c0_i32_0 : i32, i32
  }
  func.func @transform_2(%arg0: i32, %arg1: i32) -> i32 {
    %c0_i32 = arith.constant 0 : i32
    %c0_i32_0 = arith.constant 0 : i32
    return %c0_i32 : i32
  }
  func.func @transform_3(%arg0: i32, %arg1: i32) -> (i32, i32) {
    %c0_i32 = arith.constant 0 : i32
    %c0_i32_0 = arith.constant 0 : i32
    %c0_i32_1 = arith.constant 0 : i32
    return %c0_i32, %c0_i32_0 : i32, i32
  }
  func.func @transform_4(%arg0: i32, %arg1: i32) -> (i32, i32) {
    %c0_i32 = arith.constant 0 : i32
    %c0_i32_0 = arith.constant 0 : i32
    %c0_i32_1 = arith.constant 0 : i32
    return %c0_i32, %c0_i32_0 : i32, i32
  }
  func.func @transform_5(%arg0: i32, %arg1: i32) -> (i32, i32, i32, i32) {
    %c0_i32 = arith.constant 0 : i32
    %c0_i32_0 = arith.constant 0 : i32
    %c0_i32_1 = arith.constant 0 : i32
    return %arg0, %c0_i32, %arg1, %c0_i32_0 : i32, i32, i32, i32
  }
}

</mosaic_0001>

<llo_original>
// kernel: time_mixing.1
$region0: #{time_mixing.1}
  #allocation0 [shape = 'u32[]', space=smem, size = 0x4, offset = 0x4, fixed_abs, tag = 'smem constant byte address 0x4 - core index']
  #allocation1 [shape = 'u32[72,128]{1,0:T(1,128)}', space=vmem, size = 0x9000, scoped, tag = 'internal scratch']
  %s0 = inlined_call_operand.hbm [shape: f32[2,8,4,128], index: 0, kind: input, shape index: {}]
  %s1 = inlined_call_operand.hbm [shape: f32[8,8], index: 1, kind: input, shape index: {}]
  %s2 = inlined_call_operand.vmem [shape: f32[8], index: 2, kind: input, shape index: {}]
  %s3 = inlined_call_operand.vmem [shape: f32[1,128], index: 3, kind: input, shape index: {}]
  %s4 = inlined_call_operand.vmem [shape: f32[1,128], index: 4, kind: input, shape index: {}]
  %s5 = inlined_call_operand.hbm [shape: f32[2,8,4,128], index: 5, kind: output, shape index: {}]
  %s6 = sld [smem:[#allocation0]]
  $region65: #{time_mixing.1} parent=0
    _
  %s8 = ssub.s32 1, %s6
  %s9 = scalar_select 0, %s8, %s6
  $region1: #{time_mixing.1} parent=0
    #allocation2 [shape = 'u8[32768]{0}', space=vmem, size = 0x8000, scoped, tag = 'input window, operand 0']
    #allocation3 [shape = 's32[2]{0}', space=sflag, size = 0x8, scoped, tag = 'scoped memory for time_mixing.1']
    #allocation4 [shape = 's32[2]{0}', space=sflag, size = 0x8, scoped, tag = 'scoped memory for time_mixing.1']
    #allocation5 [shape = 's32[2]{0}', space=sflag, size = 0x8, scoped, tag = 'scoped memory for time_mixing.1']
    #allocation6 [shape = 's32[2]{0}', space=sflag, size = 0x8, scoped, tag = 'scoped memory for time_mixing.1']
    #allocation7 [shape = 'u8[4096]{0}', space=smem, size = 0x1000, scoped, tag = 'input window, operand 1, single buffered']
    #allocation8 [shape = 'u8[512]{0}', space=smem, size = 0x200, scoped, tag = 'input window, operand 2, single buffered']
    #allocation9 [shape = 'u8[32768]{0}', space=vmem, size = 0x8000, scoped, tag = 'output window, operand 0']
    %10 = vsyncpa [#allocation3], 0
    %s11 = scalar_lea.sflag [#allocation3], 1
    %12 = vsyncpa %s11, 0
    %13 = vsyncpa [#allocation5], 0
    %14 = vsyncpa [#allocation6], 0
    %15 = vsyncpa [#allocation4], 0
    %s16 = scalar_lea.sflag [#allocation4], 1
    %17 = vsyncpa %s16, 0
    loop: start=0, step=1, limit=4
    $region2: #{time_mixing.1} parent=1 // loop_pre_header
      _
    $region3: #{time_mixing.1} parent=1 // loop_header
      %s19 = sphi 0, %s23
      %p20 = scmp.ge.s32.totalorder %s19, 4
      %s26 = sphi 0, %s38
      %s27 = sphi 0, %s34
      %s28 = sphi 0, %s26
      %s29 = sphi 0, %s27
      %s30 = sphi 0, %s28
      %s31 = sphi 0, %s29
      %s43 = sphi 0, %s45
      %s46 = sphi 0, %s43
      %s47 = sphi 0, %s46
      %s63 = sphi 0, %s47
      %s67 = sphi 0, %s67
      %s69 = sphi 0, %s67
      %s70 = sphi 0, %s69
      %s84 = sphi 0, %s70
      %s88 = sphi 0, %s88
      %s90 = sphi 0, %s88
      %s91 = sphi 0, %s90
      %s105 = sphi 0, %s91
      %s109 = sphi 0, %s109
      %s111 = sphi 0, %s109
      %s112 = sphi 0, %s111
      %s126 = sphi 0, %s112
      %s130 = sphi 0, %s130
      %s132 = sphi 0, %s130
      %s133 = sphi 0, %s132
      %s147 = sphi 0, %s133
      %s155 = sphi 0, %s157
      %s158 = sphi 0, %s155
      %s159 = sphi 0, %s158
      %s175 = sphi 0, %s159
    $region4: #{time_mixing.1} parent=1 // loop_header_branch
      %22 = sbr.rel (%p20) target = $region8
    $region5: #{time_mixing.1} parent=1 // loop_body
      %s24 = ssub.s32 %s19, 1
      %s25 = ssub.s32 %s19, 2
      %s32 = sadd.s32 1, %s27
      %p33 = scmp.ge.s32.totalorder %s32, 1
      %s34 = scalar_select %p33, 0, %s32
      %s35 = sadd.s32 1, %s26
      %s36 = scalar_select %p33, %s35, %s26
      %p37 = scmp.ge.s32.totalorder %s36, 2
      %s38 = scalar_select %p37, 0, %s36
      %s39 = ssub.s32 %s26, %s38
      %s40 = ssub.s32 %s27, %s34
      %s41 = sor.u32 %s39, %s40
      %p42 = scmp.eq.s32.totalorder %s41, 0
      %s44 = sadd.s32 %s43, 1
      %s45 = scalar_select %p42, %s43, %s44
      %p48 = pneg %p42
      %p49 = scmp.eq.s32.totalorder %s19, 1
      %p50 = por %p48, %p49
      %p51 = scmp.ne.s32.totalorder %s43, %s46
      %p52 = scmp.eq.s32.totalorder %s19, 0
      %p53 = por %p51, %p52
      %p54 = scmp.ne.s32.totalorder %s43, %s46
      %p55 = scmp.eq.s32.totalorder %s24, 1
      %p56 = por %p54, %p55
      %p57 = scmp.ne.s32.totalorder %s46, %s47
      %p58 = scmp.eq.s32.totalorder %s24, 0
      %p59 = por %p57, %p58
      %p60 = scmp.ne.s32.totalorder %s46, %s47
      %p61 = scmp.eq.s32.totalorder %s25, 1
      %p62 = por %p60, %p61
      %p64 = scmp.ne.s32.totalorder %s47, %s63
      %p65 = scmp.eq.s32.totalorder %s25, 0
      %p66 = por %p64, %p65
      %s68 = sadd.s32 %s67, 1
      %p71 = scmp.eq.s32.totalorder %s19, 1
      %p72 = scmp.ne.s32.totalorder %s67, %s69
      %p73 = scmp.eq.s32.totalorder %s19, 0
      %p74 = por %p72, %p73
      %p75 = scmp.ne.s32.totalorder %s67, %s69
      %p76 = scmp.eq.s32.totalorder %s24, 1
      %p77 = por %p75, %p76
      %p78 = scmp.ne.s32.totalorder %s69, %s70
      %p79 = scmp.eq.s32.totalorder %s24, 0
      %p80 = por %p78, %p79
      %p81 = scmp.ne.s32.totalorder %s69, %s70
      %p82 = scmp.eq.s32.totalorder %s25, 1
      %p83 = por %p81, %p82
      %p85 = scmp.ne.s32.totalorder %s70, %s84
      %p86 = scmp.eq.s32.totalorder %s25, 0
      %p87 = por %p85, %p86
      %s89 = sadd.s32 %s88, 1
      %p92 = scmp.eq.s32.totalorder %s19, 1
      %p93 = scmp.ne.s32.totalorder %s88, %s90
      %p94 = scmp.eq.s32.totalorder %s19, 0
      %p95 = por %p93, %p94
      %p96 = scmp.ne.s32.totalorder %s88, %s90
      %p97 = scmp.eq.s32.totalorder %s24, 1
      %p98 = por %p96, %p97
      %p99 = scmp.ne.s32.totalorder %s90, %s91
      %p100 = scmp.eq.s32.totalorder %s24, 0
      %p101 = por %p99, %p100
      %p102 = scmp.ne.s32.totalorder %s90, %s91
      %p103 = scmp.eq.s32.totalorder %s25, 1
      %p104 = por %p102, %p103
      %p106 = scmp.ne.s32.totalorder %s91, %s105
      %p107 = scmp.eq.s32.totalorder %s25, 0
      %p108 = por %p106, %p107
      %s110 = sadd.s32 %s109, 1
      %p113 = scmp.eq.s32.totalorder %s19, 1
      %p114 = scmp.ne.s32.totalorder %s109, %s111
      %p115 = scmp.eq.s32.totalorder %s19, 0
      %p116 = por %p114, %p115
      %p117 = scmp.ne.s32.totalorder %s109, %s111
      %p118 = scmp.eq.s32.totalorder %s24, 1
      %p119 = por %p117, %p118
      %p120 = scmp.ne.s32.totalorder %s111, %s112
      %p121 = scmp.eq.s32.totalorder %s24, 0
      %p122 = por %p120, %p121
      %p123 = scmp.ne.s32.totalorder %s111, %s112
      %p124 = scmp.eq.s32.totalorder %s25, 1
      %p125 = por %p123, %p124
      %p127 = scmp.ne.s32.totalorder %s112, %s126
      %p128 = scmp.eq.s32.totalorder %s25, 0
      %p129 = por %p127, %p128
      %s131 = sadd.s32 %s130, 1
      %p134 = scmp.eq.s32.totalorder %s19, 1
      %p135 = scmp.ne.s32.totalorder %s130, %s132
      %p136 = scmp.eq.s32.totalorder %s19, 0
      %p137 = por %p135, %p136
      %p138 = scmp.ne.s32.totalorder %s130, %s132
      %p139 = scmp.eq.s32.totalorder %s24, 1
      %p140 = por %p138, %p139
      %p141 = scmp.ne.s32.totalorder %s132, %s133
      %p142 = scmp.eq.s32.totalorder %s24, 0
      %p143 = por %p141, %p142
      %p144 = scmp.ne.s32.totalorder %s132, %s133
      %p145 = scmp.eq.s32.totalorder %s25, 1
      %p146 = por %p144, %p145
      %p148 = scmp.ne.s32.totalorder %s133, %s147
      %p149 = scmp.eq.s32.totalorder %s25, 0
      %p150 = por %p148, %p149
      %s151 = ssub.s32 %s26, %s38
      %s152 = ssub.s32 %s27, %s34
      %s153 = sor.u32 %s151, %s152
      %p154 = scmp.eq.s32.totalorder %s153, 0
      %s156 = sadd.s32 %s155, 1
      %s157 = scalar_select %p154, %s155, %s156
      %p160 = pneg %p154
      %p161 = scmp.eq.s32.totalorder %s19, 1
      %p162 = por %p160, %p161
      %p163 = scmp.ne.s32.totalorder %s155, %s158
      %p164 = scmp.eq.s32.totalorder %s19, 0
      %p165 = por %p163, %p164
      %p166 = scmp.ne.s32.totalorder %s155, %s158
      %p167 = scmp.eq.s32.totalorder %s24, 1
      %p168 = por %p166, %p167
      %p169 = scmp.ne.s32.totalorder %s158, %s159
      %p170 = scmp.eq.s32.totalorder %s24, 0
      %p171 = por %p169, %p170
      %p172 = scmp.ne.s32.totalorder %s158, %s159
      %p173 = scmp.eq.s32.totalorder %s25, 1
      %p174 = por %p172, %p173
      %p176 = scmp.ne.s32.totalorder %s159, %s175
      %p177 = scmp.eq.s32.totalorder %s25, 0
      %p178 = por %p176, %p177
      %p179 = scmp.le.s32.totalorder 1, %s19
      %p180 = scmp.lt.s32.totalorder %s19, 3
      %p181 = pnand %p179, %p180
      %p182 = pneg %p181
      // Predicated region
      $region9: #{time_mixing.1} parent=5 // pred_check
        _
      $region10: #{time_mixing.1} parent=5 // pred_check_branch
        %184 = sbr.rel (%p181) target = $region12
      $region11: #{time_mixing.1} parent=5 // pred_region
        %s185 = ssub.s32 %s19, 1
        // Predicated region
        $region13: #{time_mixing.1} parent=11 // pred_check
          %p186 = pneg %p80
        $region14: #{time_mixing.1} parent=11 // pred_check_branch
          %188 = sbr.rel (%p186) target = $region16
        $region15: #{time_mixing.1} parent=11 // pred_region
          %190 = vsyncadd [#allocation5], 0
          %s192 = sshll.u32 %s1, 4
          %s193 = int_to_ptr.hbm [resolvable:$true] %s192
          %195 = dma.hbm_to_smem %s193, 128, [#allocation7], [#allocation5]
        $region16: #{time_mixing.1} parent=11 // pred_fallthru
          _
        // Predicated region
        $region17: #{time_mixing.1} parent=11 // pred_check
          %p196 = pneg %p101
        $region18: #{time_mixing.1} parent=11 // pred_check_branch
          %198 = sbr.rel (%p196) target = $region20
        $region19: #{time_mixing.1} parent=11 // pred_region
          %200 = vsyncadd [#allocation6], 0
          %s202 = sshll.u32 %s2, 4
          %s203 = int_to_ptr.vmem [resolvable:$true] %s202
          %205 = dma.vmem_to_smem %s203, 16, [#allocation8], [#allocation6]
        $region20: #{time_mixing.1} parent=11 // pred_fallthru
          _
        // Predicated region
        $region21: #{time_mixing.1} parent=11 // pred_check
          %p206 = pneg %p122
        $region22: #{time_mixing.1} parent=11 // pred_check_branch
          %208 = sbr.rel (%p206) target = $region24
        $region23: #{time_mixing.1} parent=11 // pred_region
          _
        $region24: #{time_mixing.1} parent=11 // pred_fallthru
          _
        // Predicated region
        $region25: #{time_mixing.1} parent=11 // pred_check
          %p209 = pneg %p143
        $region26: #{time_mixing.1} parent=11 // pred_check_branch
          %211 = sbr.rel (%p209) target = $region28
        $region27: #{time_mixing.1} parent=11 // pred_region
          _
        $region28: #{time_mixing.1} parent=11 // pred_fallthru
          _
      $region12: #{time_mixing.1} parent=5 // pred_fallthru
        _
      %p212 = scmp.lt.s32.totalorder %s19, 2
      // Predicated region
      $region29: #{time_mixing.1} parent=5 // pred_check
        %p213 = pneg %p212
      $region30: #{time_mixing.1} parent=5 // pred_check_branch
        %215 = sbr.rel (%p213) target = $region32
      $region31: #{time_mixing.1} parent=5 // pred_region
        // Predicated region
        $region33: #{time_mixing.1} parent=31 // pred_check
          %p216 = pneg %p53
        $region34: #{time_mixing.1} parent=31 // pred_check_branch
          %218 = sbr.rel (%p216) target = $region36
        $region35: #{time_mixing.1} parent=31 // pred_region
          %s219 = sand.u32 %s43, 1
          %s220 = scalar_lea.sflag [#allocation3], %s219
          %s221 = sand.u32 %s43, 1
          %s222 = smul.addr %s221, 32
          %s223 = scalar_lea.vmem [#allocation2], %s222
          %225 = vsyncadd %s220, 0
          %s226 = smul.addr %s26, 8
          %s227 = sadd.s32 %s27, %s226
          %s228 = smul.addr %s227, 4
          %s229 = scalar_lea.hbm %s0, %s228
          %s230 = sshll.u32 %s229, 4
          %s231 = int_to_ptr.hbm [resolvable:$true] %s230
          %s232 = sshll.u32 %s223, 4
          %s233 = int_to_ptr.vmem [resolvable:$true] %s232
          %238 = dma.hbm_to_vmem [thread:$0]  %s231, 512, %s233, %s220, 64, 64, 4
        $region36: #{time_mixing.1} parent=31 // pred_fallthru
          _
      $region32: #{time_mixing.1} parent=5 // pred_fallthru
        _
      %p239 = scmp.le.s32.totalorder 1, %s19
      %p240 = scmp.lt.s32.totalorder %s19, 3
      %p241 = pnand %p239, %p240
      %p242 = pneg %p241
      // Predicated region
      $region37: #{time_mixing.1} parent=5 // pred_check
        _
      $region38: #{time_mixing.1} parent=5 // pred_check_branch
        %244 = sbr.rel (%p241) target = $region40
      $region39: #{time_mixing.1} parent=5 // pred_region
        %s245 = ssub.s32 %s19, 1
        %s246 = sand.u32 %s46, 1
        %s247 = scalar_lea.sflag [#allocation3], %s246
        %s248 = sand.u32 %s46, 1
        %s249 = smul.addr %s248, 32
        %s250 = scalar_lea.vmem [#allocation2], %s249
        // Predicated region
        $region41: #{time_mixing.1} parent=39 // pred_check
          %p251 = pneg %p59
        $region42: #{time_mixing.1} parent=39 // pred_check_branch
          %253 = sbr.rel (%p251) target = $region44
        $region43: #{time_mixing.1} parent=39 // pred_region
          %255 = dma.done %s247, 512
        $region44: #{time_mixing.1} parent=39 // pred_fallthru
          _
        // Predicated region
        $region45: #{time_mixing.1} parent=39 // pred_check
          %p256 = pneg %p80
        $region46: #{time_mixing.1} parent=39 // pred_check_branch
          %258 = sbr.rel (%p256) target = $region48
        $region47: #{time_mixing.1} parent=39 // pred_region
          %260 = dma.done [#allocation5], 128
        $region48: #{time_mixing.1} parent=39 // pred_fallthru
          _
        // Predicated region
        $region49: #{time_mixing.1} parent=39 // pred_check
          %p261 = pneg %p101
        $region50: #{time_mixing.1} parent=39 // pred_check_branch
          %263 = sbr.rel (%p261) target = $region52
        $region51: #{time_mixing.1} parent=39 // pred_region
          %265 = dma.done [#allocation6], 16
        $region52: #{time_mixing.1} parent=39 // pred_fallthru
          _
        %266 = sfence
        %s267 = sand.u32 %s46, 1
        %s268 = scalar_lea.sflag [#allocation3], %s267
        %s269 = sand.u32 %s46, 1
        %s270 = smul.addr %s269, 32
        %s271 = scalar_lea.vmem [#allocation2], %s270
        %p272 = pneg %p59
        %p273 = pneg %p56
        %p274 = pneg %p80
        %p275 = pneg %p77
        %p276 = pneg %p101
        %p277 = pneg %p98
        %p278 = pneg %p122
        %p279 = pneg %p119
        %p280 = pneg %p143
        %p281 = pneg %p140
        %p282 = pneg %p171
        %p283 = pneg %p168
        %s284 = sand.u32 %s158, 1
        %s285 = scalar_lea.sflag [#allocation4], %s284
        %s286 = sand.u32 %s158, 1
        %s287 = smul.addr %s286, 32
        %s288 = scalar_lea.vmem [#allocation9], %s287
        %v289 = vld [vmem:[%s3] sm:$0x1]
        %v290 = vld [vmem:[%s4] sm:$0x1]
        %v291 = vld [vmem:[%s250] sm:$0xf]
        %s292 = sld [smem:[#allocation7]]
        %v293 = vstv %s292
        %v294 = vmul.f32 %v291, %v293
        %s295 = scalar_lea.vmem %s250, 4 [#allocation2]
        %v296 = vld [vmem:[%s295] sm:$0xf]
        %s297 = sld [smem:[#allocation7 + $0x1]]
        %v298 = vstv %s297
        %v299 = vmul.f32 %v296, %v298
        %v300 = vadd.f32 %v294, %v299
        %s301 = scalar_lea.vmem %s250, 8 [#allocation2]
        %v302 = vld [vmem:[%s301] sm:$0xf]
        %s303 = sld [smem:[#allocation7 + $0x2]]
        %v304 = vstv %s303
        %v305 = vmul.f32 %v302, %v304
        %v306 = vadd.f32 %v300, %v305
        %s307 = scalar_lea.vmem %s250, 12 [#allocation2]
        %v308 = vld [vmem:[%s307] sm:$0xf]
        %s309 = sld [smem:[#allocation7 + $0x3]]
        %v310 = vstv %s309
        %v311 = vmul.f32 %v308, %v310
        %v312 = vadd.f32 %v306, %v311
        %s313 = scalar_lea.vmem %s250, 16 [#allocation2]
        %v314 = vld [vmem:[%s313] sm:$0xf]
        %s315 = sld [smem:[#allocation7 + $0x4]]
        %v316 = vstv %s315
        %v317 = vmul.f32 %v314, %v316
        %v318 = vadd.f32 %v312, %v317
        %s319 = scalar_lea.vmem %s250, 20 [#allocation2]
        %v320 = vld [vmem:[%s319] sm:$0xf]
        %s321 = sld [smem:[#allocation7 + $0x5]]
        %v322 = vstv %s321
        %v323 = vmul.f32 %v320, %v322
        %v324 = vadd.f32 %v318, %v323
        %s325 = scalar_lea.vmem %s250, 24 [#allocation2]
        %v326 = vld [vmem:[%s325] sm:$0xf]
        %s327 = sld [smem:[#allocation7 + $0x6]]
        %v328 = vstv %s327
        %v329 = vmul.f32 %v326, %v328
        %v330 = vadd.f32 %v324, %v329
        %s331 = scalar_lea.vmem %s250, 28 [#allocation2]
        %v332 = vld [vmem:[%s331] sm:$0xf]
        %s333 = sld [smem:[#allocation7 + $0x7]]
        %v334 = vstv %s333
        %v335 = vmul.f32 %v332, %v334
        %v336 = vadd.f32 %v330, %v335
        %s337 = sld [smem:[#allocation8]]
        %v338 = vstv %s337
        %v339 = vadd.f32 %v336, %v338
        %v340 = vmax.f32 %v339, 0.0
        %v341 = vadd.f32 %v291, %v340
        %vm342 = vcmask 1043456
        %v343 = vsel %vm342, %v341, 0.0
        %344 = vadd.xlane.f32.xlu0 %v343
        %v345 = vpop.xlane.xlu0 %344
        %v346 = vrcp.pop 128.0
        %v347 = vmul.f32 128.0, %v346
        %v348 = vsub.f32 1.0, %v347
        %v349 = vmul.f32 %v346, %v348
        %v350 = vadd.f32 %v346, %v349
        %vm351 = vweird.f32 %v346
        %v352 = vsel %vm351, %v346, %v350
        %v353 = vmul.f32 %v345, %v352
        %v354 = vsub.f32 %v341, %v353
        %v355 = vmul.f32 %v354, %v354
        %v356 = vsel %vm342, %v355, 0.0
        %357 = vadd.xlane.f32.xlu0 %v356
        %v358 = vpop.xlane.xlu0 %357
        %v359 = vmul.f32 %v358, %v352
        %v360 = vadd.f32 %v359, 1e-05
        %v361 = vrsqrt.pop %v360
        %v362 = vmul.f32 %v361, %v360
        %v363 = vmul.f32 %v362, %v361
        %v364 = vmul.f32 0.5, %v363
        %v365 = vsub.f32 1.5, %v364
        %v366 = vmul.f32 %v361, %v365
        %vm367 = vweird.f32 %v360
        %vm368 = vweird.f32 %v361
        %vm369 = vmor %vm367, %vm368
        %v370 = vsel %vm369, %v361, %v366
        %v371 = vmul.f32 %v354, %v370
        %v373 = vperm.slane %v289, 0
        %v375 = vmul.f32 %v371, %v373
        %v377 = vperm.slane %v290, 0
        %v379 = vadd.f32 %v375, %v377
        %380 = vst [vmem:[%s288] sm:$0xf] %v379
        %v381 = vld [vmem:[%s250] sm:$0xf]
        %s382 = sld [smem:[#allocation7 + $0x80]]
        %v383 = vstv %s382
        %v384 = vmul.f32 %v381, %v383
        %v385 = vld [vmem:[%s295] sm:$0xf]
        %s386 = sld [smem:[#allocation7 + $0x81]]
        %v387 = vstv %s386
        %v388 = vmul.f32 %v385, %v387
        %v389 = vadd.f32 %v384, %v388
        %v390 = vld [vmem:[%s301] sm:$0xf]
        %s391 = sld [smem:[#allocation7 + $0x82]]
        %v392 = vstv %s391
        %v393 = vmul.f32 %v390, %v392
        %v394 = vadd.f32 %v389, %v393
        %v395 = vld [vmem:[%s307] sm:$0xf]
        %s396 = sld [smem:[#allocation7 + $0x83]]
        %v397 = vstv %s396
        %v398 = vmul.f32 %v395, %v397
        %v399 = vadd.f32 %v394, %v398
        %v400 = vld [vmem:[%s313] sm:$0xf]
        %s401 = sld [smem:[#allocation7 + $0x84]]
        %v402 = vstv %s401
        %v403 = vmul.f32 %v400, %v402
        %v404 = vadd.f32 %v399, %v403
        %v405 = vld [vmem:[%s319] sm:$0xf]
        %s406 = sld [smem:[#allocation7 + $0x85]]
        %v407 = vstv %s406
        %v408 = vmul.f32 %v405, %v407
        %v409 = vadd.f32 %v404, %v408
        %v410 = vld [vmem:[%s325] sm:$0xf]
        %s411 = sld [smem:[#allocation7 + $0x86]]
        %v412 = vstv %s411
        %v413 = vmul.f32 %v410, %v412
        %v414 = vadd.f32 %v409, %v413
        %v415 = vld [vmem:[%s331] sm:$0xf]
        %s416 = sld [smem:[#allocation7 + $0x87]]
        %v417 = vstv %s416
        %v418 = vmul.f32 %v415, %v417
        %v419 = vadd.f32 %v414, %v418
        %s420 = sld [smem:[#allocation8 + $0x1]]
        %v421 = vstv %s420
        %v422 = vadd.f32 %v419, %v421
        %v423 = vmax.f32 %v422, 0.0
        %v424 = vadd.f32 %v385, %v423
        %v425 = vsel %vm342, %v424, 0.0
        %426 = vadd.xlane.f32.xlu0 %v425
        %v427 = vpop.xlane.xlu0 %426
        %v428 = vmul.f32 %v427, %v352
        %v429 = vsub.f32 %v424, %v428
        %v430 = vmul.f32 %v429, %v429
        %v431 = vsel %vm342, %v430, 0.0
        %432 = vadd.xlane.f32.xlu0 %v431
        %v433 = vpop.xlane.xlu0 %432
        %v434 = vmul.f32 %v433, %v352
        %v435 = vadd.f32 %v434, 1e-05
        %v436 = vrsqrt.pop %v435
        %v437 = vmul.f32 %v436, %v435
        %v438 = vmul.f32 %v437, %v436
        %v439 = vmul.f32 0.5, %v438
        %v440 = vsub.f32 1.5, %v439
        %v441 = vmul.f32 %v436, %v440
        %vm442 = vweird.f32 %v435
        %vm443 = vweird.f32 %v436
        %vm444 = vmor %vm442, %vm443
        %v445 = vsel %vm444, %v436, %v441
        %v446 = vmul.f32 %v429, %v445
        %v447 = vmul.f32 %v446, %v373
        %v448 = vadd.f32 %v447, %v377
        %s449 = scalar_lea.vmem %s288, 4 [#allocation9]
        %450 = vst [vmem:[%s449] sm:$0xf] %v448
        %v451 = vld [vmem:[%s250] sm:$0xf]
        %s452 = sld [smem:[#allocation7 + $0x100]]
        %v453 = vstv %s452
        %v454 = vmul.f32 %v451, %v453
        %v455 = vld [vmem:[%s295] sm:$0xf]
        %s456 = sld [smem:[#allocation7 + $0x101]]
        %v457 = vstv %s456
        %v458 = vmul.f32 %v455, %v457
        %v459 = vadd.f32 %v454, %v458
        %v460 = vld [vmem:[%s301] sm:$0xf]
        %s461 = sld [smem:[#allocation7 + $0x102]]
        %v462 = vstv %s461
        %v463 = vmul.f32 %v460, %v462
        %v464 = vadd.f32 %v459, %v463
        %v465 = vld [vmem:[%s307] sm:$0xf]
        %s466 = sld [smem:[#allocation7 + $0x103]]
        %v467 = vstv %s466
        %v468 = vmul.f32 %v465, %v467
        %v469 = vadd.f32 %v464, %v468
        %v470 = vld [vmem:[%s313] sm:$0xf]
        %s471 = sld [smem:[#allocation7 + $0x104]]
        %v472 = vstv %s471
        %v473 = vmul.f32 %v470, %v472
        %v474 = vadd.f32 %v469, %v473
        %v475 = vld [vmem:[%s319] sm:$0xf]
        %s476 = sld [smem:[#allocation7 + $0x105]]
        %v477 = vstv %s476
        %v478 = vmul.f32 %v475, %v477
        %v479 = vadd.f32 %v474, %v478
        %v480 = vld [vmem:[%s325] sm:$0xf]
        %s481 = sld [smem:[#allocation7 + $0x106]]
        %v482 = vstv %s481
        %v483 = vmul.f32 %v480, %v482
        %v484 = vadd.f32 %v479, %v483
        %v485 = vld [vmem:[%s331] sm:$0xf]
        %s486 = sld [smem:[#allocation7 + $0x107]]
        %v487 = vstv %s486
        %v488 = vmul.f32 %v485, %v487
        %v489 = vadd.f32 %v484, %v488
        %s490 = sld [smem:[#allocation8 + $0x2]]
        %v491 = vstv %s490
        %v492 = vadd.f32 %v489, %v491
        %v493 = vmax.f32 %v492, 0.0
        %v494 = vadd.f32 %v460, %v493
        %v495 = vsel %vm342, %v494, 0.0
        %496 = vadd.xlane.f32.xlu0 %v495
        %v497 = vpop.xlane.xlu0 %496
        %v498 = vmul.f32 %v497, %v352
        %v499 = vsub.f32 %v494, %v498
        %v500 = vmul.f32 %v499, %v499
        %v501 = vsel %vm342, %v500, 0.0
        %502 = vadd.xlane.f32.xlu0 %v501
        %v503 = vpop.xlane.xlu0 %502
        %v504 = vmul.f32 %v503, %v352
        %v505 = vadd.f32 %v504, 1e-05
        %v506 = vrsqrt.pop %v505
        %v507 = vmul.f32 %v506, %v505
        %v508 = vmul.f32 %v507, %v506
        %v509 = vmul.f32 0.5, %v508
        %v510 = vsub.f32 1.5, %v509
        %v511 = vmul.f32 %v506, %v510
        %vm512 = vweird.f32 %v505
        %vm513 = vweird.f32 %v506
        %vm514 = vmor %vm512, %vm513
        %v515 = vsel %vm514, %v506, %v511
        %v516 = vmul.f32 %v499, %v515
        %v517 = vmul.f32 %v516, %v373
        %v518 = vadd.f32 %v517, %v377
        %s519 = scalar_lea.vmem %s288, 8 [#allocation9]
        %520 = vst [vmem:[%s519] sm:$0xf] %v518
        %v521 = vld [vmem:[%s250] sm:$0xf]
        %s522 = sld [smem:[#allocation7 + $0x180]]
        %v523 = vstv %s522
        %v524 = vmul.f32 %v521, %v523
        %v525 = vld [vmem:[%s295] sm:$0xf]
        %s526 = sld [smem:[#allocation7 + $0x181]]
        %v527 = vstv %s526
        %v528 = vmul.f32 %v525, %v527
        %v529 = vadd.f32 %v524, %v528
        %v530 = vld [vmem:[%s301] sm:$0xf]
        %s531 = sld [smem:[#allocation7 + $0x182]]
        %v532 = vstv %s531
        %v533 = vmul.f32 %v530, %v532
        %v534 = vadd.f32 %v529, %v533
        %v535 = vld [vmem:[%s307] sm:$0xf]
        %s536 = sld [smem:[#allocation7 + $0x183]]
        %v537 = vstv %s536
        %v538 = vmul.f32 %v535, %v537
        %v539 = vadd.f32 %v534, %v538
        %v540 = vld [vmem:[%s313] sm:$0xf]
        %s541 = sld [smem:[#allocation7 + $0x184]]
        %v542 = vstv %s541
        %v543 = vmul.f32 %v540, %v542
        %v544 = vadd.f32 %v539, %v543
        %v545 = vld [vmem:[%s319] sm:$0xf]
        %s546 = sld [smem:[#allocation7 + $0x185]]
        %v547 = vstv %s546
        %v548 = vmul.f32 %v545, %v547
        %v549 = vadd.f32 %v544, %v548
        %v550 = vld [vmem:[%s325] sm:$0xf]
        %s551 = sld [smem:[#allocation7 + $0x186]]
        %v552 = vstv %s551
        %v553 = vmul.f32 %v550, %v552
        %v554 = vadd.f32 %v549, %v553
        %v555 = vld [vmem:[%s331] sm:$0xf]
        %s556 = sld [smem:[#allocation7 + $0x187]]
        %v557 = vstv %s556
        %v558 = vmul.f32 %v555, %v557
        %v559 = vadd.f32 %v554, %v558
        %s560 = sld [smem:[#allocation8 + $0x3]]
        %v561 = vstv %s560
        %v562 = vadd.f32 %v559, %v561
        %v563 = vmax.f32 %v562, 0.0
        %v564 = vadd.f32 %v535, %v563
        %v565 = vsel %vm342, %v564, 0.0
        %566 = vadd.xlane.f32.xlu0 %v565
        %v567 = vpop.xlane.xlu0 %566
        %v568 = vmul.f32 %v567, %v352
        %v569 = vsub.f32 %v564, %v568
        %v570 = vmul.f32 %v569, %v569
        %v571 = vsel %vm342, %v570, 0.0
        %572 = vadd.xlane.f32.xlu0 %v571
        %v573 = vpop.xlane.xlu0 %572
        %v574 = vmul.f32 %v573, %v352
        %v575 = vadd.f32 %v574, 1e-05
        %v576 = vrsqrt.pop %v575
        %v577 = vmul.f32 %v576, %v575
        %v578 = vmul.f32 %v577, %v576
        %v579 = vmul.f32 0.5, %v578
        %v580 = vsub.f32 1.5, %v579
        %v581 = vmul.f32 %v576, %v580
        %vm582 = vweird.f32 %v575
        %vm583 = vweird.f32 %v576
        %vm584 = vmor %vm582, %vm583
        %v585 = vsel %vm584, %v576, %v581
        %v586 = vmul.f32 %v569, %v585
        %v587 = vmul.f32 %v586, %v373
        %v588 = vadd.f32 %v587, %v377
        %s589 = scalar_lea.vmem %s288, 12 [#allocation9]
        %590 = vst [vmem:[%s589] sm:$0xf] %v588
        %v591 = vld [vmem:[%s250] sm:$0xf]
        %s592 = sld [smem:[#allocation7 + $0x200]]
        %v593 = vstv %s592
        %v594 = vmul.f32 %v591, %v593
        %v595 = vld [vmem:[%s295] sm:$0xf]
        %s596 = sld [smem:[#allocation7 + $0x201]]
        %v597 = vstv %s596
        %v598 = vmul.f32 %v595, %v597
        %v599 = vadd.f32 %v594, %v598
        %v600 = vld [vmem:[%s301] sm:$0xf]
        %s601 = sld [smem:[#allocation7 + $0x202]]
        %v602 = vstv %s601
        %v603 = vmul.f32 %v600, %v602
        %v604 = vadd.f32 %v599, %v603
        %v605 = vld [vmem:[%s307] sm:$0xf]
        %s606 = sld [smem:[#allocation7 + $0x203]]
        %v607 = vstv %s606
        %v608 = vmul.f32 %v605, %v607
        %v609 = vadd.f32 %v604, %v608
        %v610 = vld [vmem:[%s313] sm:$0xf]
        %s611 = sld [smem:[#allocation7 + $0x204]]
        %v612 = vstv %s611
        %v613 = vmul.f32 %v610, %v612
        %v614 = vadd.f32 %v609, %v613
        %v615 = vld [vmem:[%s319] sm:$0xf]
        %s616 = sld [smem:[#allocation7 + $0x205]]
        %v617 = vstv %s616
        %v618 = vmul.f32 %v615, %v617
        %v619 = vadd.f32 %v614, %v618
        %v620 = vld [vmem:[%s325] sm:$0xf]
        %s621 = sld [smem:[#allocation7 + $0x206]]
        %v622 = vstv %s621
        %v623 = vmul.f32 %v620, %v622
        %v624 = vadd.f32 %v619, %v623
        %v625 = vld [vmem:[%s331] sm:$0xf]
        %s626 = sld [smem:[#allocation7 + $0x207]]
        %v627 = vstv %s626
        %v628 = vmul.f32 %v625, %v627
        %v629 = vadd.f32 %v624, %v628
        %s630 = sld [smem:[#allocation8 + $0x4]]
        %v631 = vstv %s630
        %v632 = vadd.f32 %v629, %v631
        %v633 = vmax.f32 %v632, 0.0
        %v634 = vadd.f32 %v610, %v633
        %v635 = vsel %vm342, %v634, 0.0
        %636 = vadd.xlane.f32.xlu0 %v635
        %v637 = vpop.xlane.xlu0 %636
        %v638 = vmul.f32 %v637, %v352
        %v639 = vsub.f32 %v634, %v638
        %v640 = vmul.f32 %v639, %v639
        %v641 = vsel %vm342, %v640, 0.0
        %642 = vadd.xlane.f32.xlu0 %v641
        %v643 = vpop.xlane.xlu0 %642
        %v644 = vmul.f32 %v643, %v352
        %v645 = vadd.f32 %v644, 1e-05
        %v646 = vrsqrt.pop %v645
        %v647 = vmul.f32 %v646, %v645
        %v648 = vmul.f32 %v647, %v646
        %v649 = vmul.f32 0.5, %v648
        %v650 = vsub.f32 1.5, %v649
        %v651 = vmul.f32 %v646, %v650
        %vm652 = vweird.f32 %v645
        %vm653 = vweird.f32 %v646
        %vm654 = vmor %vm652, %vm653
        %v655 = vsel %vm654, %v646, %v651
        %v656 = vmul.f32 %v639, %v655
        %v657 = vmul.f32 %v656, %v373
        %v658 = vadd.f32 %v657, %v377
        %s659 = scalar_lea.vmem %s288, 16 [#allocation9]
        %660 = vst [vmem:[%s659] sm:$0xf] %v658
        %v661 = vld [vmem:[%s250] sm:$0xf]
        %s662 = sld [smem:[#allocation7 + $0x280]]
        %v663 = vstv %s662
        %v664 = vmul.f32 %v661, %v663
        %v665 = vld [vmem:[%s295] sm:$0xf]
        %s666 = sld [smem:[#allocation7 + $0x281]]
        %v667 = vstv %s666
        %v668 = vmul.f32 %v665, %v667
        %v669 = vadd.f32 %v664, %v668
        %v670 = vld [vmem:[%s301] sm:$0xf]
        %s671 = sld [smem:[#allocation7 + $0x282]]
        %v672 = vstv %s671
        %v673 = vmul.f32 %v670, %v672
        %v674 = vadd.f32 %v669, %v673
        %v675 = vld [vmem:[%s307] sm:$0xf]
        %s676 = sld [smem:[#allocation7 + $0x283]]
        %v677 = vstv %s676
        %v678 = vmul.f32 %v675, %v677
        %v679 = vadd.f32 %v674, %v678
        %v680 = vld [vmem:[%s313] sm:$0xf]
        %s681 = sld [smem:[#allocation7 + $0x284]]
        %v682 = vstv %s681
        %v683 = vmul.f32 %v680, %v682
        %v684 = vadd.f32 %v679, %v683
        %v685 = vld [vmem:[%s319] sm:$0xf]
        %s686 = sld [smem:[#allocation7 + $0x285]]
        %v687 = vstv %s686
        %v688 = vmul.f32 %v685, %v687
        %v689 = vadd.f32 %v684, %v688
        %v690 = vld [vmem:[%s325] sm:$0xf]
        %s691 = sld [smem:[#allocation7 + $0x286]]
        %v692 = vstv %s691
        %v693 = vmul.f32 %v690, %v692
        %v694 = vadd.f32 %v689, %v693
        %v695 = vld [vmem:[%s331] sm:$0xf]
        %s696 = sld [smem:[#allocation7 + $0x287]]
        %v697 = vstv %s696
        %v698 = vmul.f32 %v695, %v697
        %v699 = vadd.f32 %v694, %v698
        %s700 = sld [smem:[#allocation8 + $0x5]]
        %v701 = vstv %s700
        %v702 = vadd.f32 %v699, %v701
        %v703 = vmax.f32 %v702, 0.0
        %v704 = vadd.f32 %v685, %v703
        %v705 = vsel %vm342, %v704, 0.0
        %706 = vadd.xlane.f32.xlu0 %v705
        %v707 = vpop.xlane.xlu0 %706
        %v708 = vmul.f32 %v707, %v352
        %v709 = vsub.f32 %v704, %v708
        %v710 = vmul.f32 %v709, %v709
        %v711 = vsel %vm342, %v710, 0.0
        %712 = vadd.xlane.f32.xlu0 %v711
        %v713 = vpop.xlane.xlu0 %712
        %v714 = vmul.f32 %v713, %v352
        %v715 = vadd.f32 %v714, 1e-05
        %v716 = vrsqrt.pop %v715
        %v717 = vmul.f32 %v716, %v715
        %v718 = vmul.f32 %v717, %v716
        %v719 = vmul.f32 0.5, %v718
        %v720 = vsub.f32 1.5, %v719
        %v721 = vmul.f32 %v716, %v720
        %vm722 = vweird.f32 %v715
        %vm723 = vweird.f32 %v716
        %vm724 = vmor %vm722, %vm723
        %v725 = vsel %vm724, %v716, %v721
        %v726 = vmul.f32 %v709, %v725
        %v727 = vmul.f32 %v726, %v373
        %v728 = vadd.f32 %v727, %v377
        %s729 = scalar_lea.vmem %s288, 20 [#allocation9]
        %730 = vst [vmem:[%s729] sm:$0xf] %v728
        %v731 = vld [vmem:[%s250] sm:$0xf]
        %s732 = sld [smem:[#allocation7 + $0x300]]
        %v733 = vstv %s732
        %v734 = vmul.f32 %v731, %v733
        %v735 = vld [vmem:[%s295] sm:$0xf]
        %s736 = sld [smem:[#allocation7 + $0x301]]
        %v737 = vstv %s736
        %v738 = vmul.f32 %v735, %v737
        %v739 = vadd.f32 %v734, %v738
        %v740 = vld [vmem:[%s301] sm:$0xf]
        %s741 = sld [smem:[#allocation7 + $0x302]]
        %v742 = vstv %s741
        %v743 = vmul.f32 %v740, %v742
        %v744 = vadd.f32 %v739, %v743
        %v745 = vld [vmem:[%s307] sm:$0xf]
        %s746 = sld [smem:[#allocation7 + $0x303]]
        %v747 = vstv %s746
        %v748 = vmul.f32 %v745, %v747
        %v749 = vadd.f32 %v744, %v748
        %v750 = vld [vmem:[%s313] sm:$0xf]
        %s751 = sld [smem:[#allocation7 + $0x304]]
        %v752 = vstv %s751
        %v753 = vmul.f32 %v750, %v752
        %v754 = vadd.f32 %v749, %v753
        %v755 = vld [vmem:[%s319] sm:$0xf]
        %s756 = sld [smem:[#allocation7 + $0x305]]
        %v757 = vstv %s756
        %v758 = vmul.f32 %v755, %v757
        %v759 = vadd.f32 %v754, %v758
        %v760 = vld [vmem:[%s325] sm:$0xf]
        %s761 = sld [smem:[#allocation7 + $0x306]]
        %v762 = vstv %s761
        %v763 = vmul.f32 %v760, %v762
        %v764 = vadd.f32 %v759, %v763
        %v765 = vld [vmem:[%s331] sm:$0xf]
        %s766 = sld [smem:[#allocation7 + $0x307]]
        %v767 = vstv %s766
        %v768 = vmul.f32 %v765, %v767
        %v769 = vadd.f32 %v764, %v768
        %s770 = sld [smem:[#allocation8 + $0x6]]
        %v771 = vstv %s770
        %v772 = vadd.f32 %v769, %v771
        %v773 = vmax.f32 %v772, 0.0
        %v774 = vadd.f32 %v760, %v773
        %v775 = vsel %vm342, %v774, 0.0
        %776 = vadd.xlane.f32.xlu0 %v775
        %v777 = vpop.xlane.xlu0 %776
        %v778 = vmul.f32 %v777, %v352
        %v779 = vsub.f32 %v774, %v778
        %v780 = vmul.f32 %v779, %v779
        %v781 = vsel %vm342, %v780, 0.0
        %782 = vadd.xlane.f32.xlu0 %v781
        %v783 = vpop.xlane.xlu0 %782
        %v784 = vmul.f32 %v783, %v352
        %v785 = vadd.f32 %v784, 1e-05
        %v786 = vrsqrt.pop %v785
        %v787 = vmul.f32 %v786, %v785
        %v788 = vmul.f32 %v787, %v786
        %v789 = vmul.f32 0.5, %v788
        %v790 = vsub.f32 1.5, %v789
        %v791 = vmul.f32 %v786, %v790
        %vm792 = vweird.f32 %v785
        %vm793 = vweird.f32 %v786
        %vm794 = vmor %vm792, %vm793
        %v795 = vsel %vm794, %v786, %v791
        %v796 = vmul.f32 %v779, %v795
        %v797 = vmul.f32 %v796, %v373
        %v798 = vadd.f32 %v797, %v377
        %s799 = scalar_lea.vmem %s288, 24 [#allocation9]
        %800 = vst [vmem:[%s799] sm:$0xf] %v798
        %v801 = vld [vmem:[%s250] sm:$0xf]
        %s802 = sld [smem:[#allocation7 + $0x380]]
        %v803 = vstv %s802
        %v804 = vmul.f32 %v801, %v803
        %v805 = vld [vmem:[%s295] sm:$0xf]
        %s806 = sld [smem:[#allocation7 + $0x381]]
        %v807 = vstv %s806
        %v808 = vmul.f32 %v805, %v807
        %v809 = vadd.f32 %v804, %v808
        %v810 = vld [vmem:[%s301] sm:$0xf]
        %s811 = sld [smem:[#allocation7 + $0x382]]
        %v812 = vstv %s811
        %v813 = vmul.f32 %v810, %v812
        %v814 = vadd.f32 %v809, %v813
        %v815 = vld [vmem:[%s307] sm:$0xf]
        %s816 = sld [smem:[#allocation7 + $0x383]]
        %v817 = vstv %s816
        %v818 = vmul.f32 %v815, %v817
        %v819 = vadd.f32 %v814, %v818
        %v820 = vld [vmem:[%s313] sm:$0xf]
        %s821 = sld [smem:[#allocation7 + $0x384]]
        %v822 = vstv %s821
        %v823 = vmul.f32 %v820, %v822
        %v824 = vadd.f32 %v819, %v823
        %v825 = vld [vmem:[%s319] sm:$0xf]
        %s826 = sld [smem:[#allocation7 + $0x385]]
        %v827 = vstv %s826
        %v828 = vmul.f32 %v825, %v827
        %v829 = vadd.f32 %v824, %v828
        %v830 = vld [vmem:[%s325] sm:$0xf]
        %s831 = sld [smem:[#allocation7 + $0x386]]
        %v832 = vstv %s831
        %v833 = vmul.f32 %v830, %v832
        %v834 = vadd.f32 %v829, %v833
        %v835 = vld [vmem:[%s331] sm:$0xf]
        %s836 = sld [smem:[#allocation7 + $0x387]]
        %v837 = vstv %s836
        %v838 = vmul.f32 %v835, %v837
        %v839 = vadd.f32 %v834, %v838
        %s840 = sld [smem:[#allocation8 + $0x7]]
        %v841 = vstv %s840
        %v842 = vadd.f32 %v839, %v841
        %v843 = vmax.f32 %v842, 0.0
        %v844 = vadd.f32 %v835, %v843
        %v845 = vsel %vm342, %v844, 0.0
        %846 = vadd.xlane.f32.xlu0 %v845
        %v847 = vpop.xlane.xlu0 %846
        %v848 = vmul.f32 %v847, %v352
        %v849 = vsub.f32 %v844, %v848
        %v850 = vmul.f32 %v849, %v849
        %v851 = vsel %vm342, %v850, 0.0
        %852 = vadd.xlane.f32.xlu0 %v851
        %v853 = vpop.xlane.xlu0 %852
        %v854 = vmul.f32 %v853, %v352
        %v855 = vadd.f32 %v854, 1e-05
        %v856 = vrsqrt.pop %v855
        %v857 = vmul.f32 %v856, %v855
        %v858 = vmul.f32 %v857, %v856
        %v859 = vmul.f32 0.5, %v858
        %v860 = vsub.f32 1.5, %v859
        %v861 = vmul.f32 %v856, %v860
        %vm862 = vweird.f32 %v855
        %vm863 = vweird.f32 %v856
        %vm864 = vmor %vm862, %vm863
        %v865 = vsel %vm864, %v856, %v861
        %v866 = vmul.f32 %v849, %v865
        %v867 = vmul.f32 %v866, %v373
        %v868 = vadd.f32 %v867, %v377
        %s869 = scalar_lea.vmem %s288, 28 [#allocation9]
        %870 = vst [vmem:[%s869] sm:$0xf] %v868
        %s871 = sand.u32 %s158, 1
        %s872 = scalar_lea.sflag [#allocation4], %s871
        %s873 = sand.u32 %s158, 1
        %s874 = smul.addr %s873, 32
        %s875 = scalar_lea.vmem [#allocation9], %s874
        // Predicated region
        $region53: #{time_mixing.1} parent=39 // pred_check
          %p876 = pneg %p168
        $region54: #{time_mixing.1} parent=39 // pred_check_branch
          %878 = sbr.rel (%p876) target = $region56
        $region55: #{time_mixing.1} parent=39 // pred_region
          %880 = vsyncadd %s872, 0
          %s881 = smul.addr %s28, 8
          %s882 = sadd.s32 %s29, %s881
          %s883 = smul.addr %s882, 4
          %s884 = scalar_lea.hbm %s5, %s883
          %s885 = sshll.u32 %s875, 4
          %s886 = int_to_ptr.vmem [resolvable:$true] %s885
          %s887 = sshll.u32 %s884, 4
          %s888 = int_to_ptr.hbm [resolvable:$true] %s887
          %893 = dma.vmem_to_hbm [thread:$0]  %s886, 512, %s888, %s872, 64, 64, 4
        $region56: #{time_mixing.1} parent=39 // pred_fallthru
          _
      $region40: #{time_mixing.1} parent=5 // pred_fallthru
        _
      %p894 = scmp.le.s32.totalorder 2, %s19
      // Predicated region
      $region57: #{time_mixing.1} parent=5 // pred_check
        %p895 = pneg %p894
      $region58: #{time_mixing.1} parent=5 // pred_check_branch
        %897 = sbr.rel (%p895) target = $region60
      $region59: #{time_mixing.1} parent=5 // pred_region
        %s898 = ssub.s32 %s19, 2
        // Predicated region
        $region61: #{time_mixing.1} parent=59 // pred_check
          %p899 = pneg %p174
        $region62: #{time_mixing.1} parent=59 // pred_check_branch
          %901 = sbr.rel (%p899) target = $region64
        $region63: #{time_mixing.1} parent=59 // pred_region
          %s902 = sand.u32 %s159, 1
          %s903 = scalar_lea.sflag [#allocation4], %s902
          %s904 = sand.u32 %s159, 1
          %s905 = smul.addr %s904, 32
          %s906 = scalar_lea.vmem [#allocation9], %s905
          %908 = dma.done %s903, 512
        $region64: #{time_mixing.1} parent=59 // pred_fallthru
          _
      $region60: #{time_mixing.1} parent=5 // pred_fallthru
        _
    $region6: #{time_mixing.1} parent=1 // loop_footer
      %s23 = sadd.s32 1, %s19
    $region7: #{time_mixing.1} parent=1 // loop_footer_branch
      %18 = sbr.rel target = $region3
    $region8: #{time_mixing.1} parent=1 // loop_exit
      _
    %909 = vsyncpa [#allocation3], 1
    %s910 = scalar_lea.sflag [#allocation3], 1
    %911 = vsyncpa %s910, 1
    %912 = vsyncpa [#allocation4], 1
    %s913 = scalar_lea.sflag [#allocation4], 1
    %914 = vsyncpa %s913, 1
    %915 = vsyncpa [#allocation5], 1
    %s916 = scalar_lea.sflag [#allocation5], 1
    %917 = vsyncpa %s916, 1
    %918 = vsyncpa [#allocation6], 1
    %s919 = scalar_lea.sflag [#allocation6], 1
    %920 = vsyncpa %s919, 1

</llo_original>
